<compile_context>
chip_gen: v7x
topology: tpu7x:2x2x1
jax: 0.10.0
libtpu: 0.0.40
codegen_flags: <defaults>
</compile_context>

<pallas_src>
import functools

import jax
import jax.numpy as jnp
from jax import lax
from jax.experimental import pallas as pl
from jax.experimental.pallas import tpu as pltpu


def _memory_kernel(q_ref, keys_ref, keys_t_ref,               # inputs
                   uq_ref, um_ref, ssq_num_ref, ssq_den_ref,  # outputs
                   ssm_ref, loss_ref,
                   emax_ref, sep_acc_ref, comp_acc_ref,       # scratch
                   *, n_total):
    f32 = jnp.float32
    bf16 = jnp.bfloat16

    D, TN = q_ref.shape            # (key_dim, n-tile); N is the lane axis
    M = keys_ref.shape[0]
    i = pl.program_id(0)
    last = pl.num_programs(0) - 1

    # ---- init resident accumulators on the first N-tile --------------------
    @pl.when(i == 0)
    def _init():
        um_ref[...] = jnp.zeros_like(um_ref)
        ssq_den_ref[...] = jnp.zeros_like(ssq_den_ref)
        emax_ref[...] = jnp.zeros_like(emax_ref)
        sep_acc_ref[...] = jnp.zeros_like(sep_acc_ref)
        comp_acc_ref[...] = jnp.zeros_like(comp_acc_ref)

    keys = keys_ref[...].astype(f32)                     # (M, D)
    x = q_ref[...].astype(f32)                           # (D, TN)

    # ---- F.normalize(query, dim=1): per-column L2 over the D (sublane) axis
    inv_q = lax.rsqrt(jnp.maximum(jnp.sum(x * x, axis=0, keepdims=True), 1e-24))
    q = x * inv_q                                        # unit-norm columns
    q_bf = q.astype(bf16)

    # ---- score[m, n] = keys[m] . q[:, n]   -> (M, TN), lane-dense in N -----
    score = jnp.dot(keys.astype(bf16), q_bf, preferred_element_type=f32)

    # Fixed per-slot shift c[m] = ||keys[m]|| >= max_n score[m, n]; makes the
    # streaming dim-0 softmax consistent across all N-tiles (no rescaling).
    c = jnp.sqrt(jnp.sum(keys * keys, axis=1, keepdims=True))   # (M, 1)
    e0 = jnp.exp(score - c)                                     # (M, TN)
    ssq_num_ref[...] = e0                                       # numerator out

    # ---- softmax over memory slots (torch dim=1): per column over M --------
    m1 = jnp.max(score, axis=0, keepdims=True)                  # (1, TN)
    e1 = jnp.exp(score - m1)
    ssm = e1 * pl.reciprocal(jnp.sum(e1, axis=0, keepdims=True), approx=True)
    ssm_ref[...] = ssm

    # ---- top-2 memory slots per query (ties -> lowest index, like topk) ----
    row_ids = lax.broadcasted_iota(jnp.int32, (M, TN), 0)
    idx1 = jnp.min(jnp.where(score >= m1, row_ids, M), axis=0, keepdims=True)
    onehot1 = (row_ids == idx1).astype(f32)                     # (M, TN)
    masked = jnp.where(row_ids == idx1, -jnp.inf, score)
    m2 = jnp.max(masked, axis=0, keepdims=True)
    idx2 = jnp.min(jnp.where(masked >= m2, row_ids, M), axis=0, keepdims=True)
    onehot2 = (row_ids == idx2).astype(f32)

    # ---- fused gather/read matmul: keys^T @ [onehot1 | onehot2 | ssm] ------
    stacked = jnp.concatenate([onehot1, onehot2, ssm], axis=1).astype(bf16)
    fused = jnp.dot(keys_t_ref[...].astype(bf16), stacked,
                    preferred_element_type=f32)                 # (D, 3*TN)
    pos_t = fused[:, :TN]          # top-1 keys  (D, TN)
    neg_t = fused[:, TN:2 * TN]    # top-2 keys  (D, TN)
    cm_t = fused[:, 2 * TN:]       # ssm @ keys  (D, TN)

    # ---- read(): updated_query tile, two sublane-aligned slice stores ------
    uq_ref[:D, :] = q
    uq_ref[D:, :] = cm_t

    # ---- losses (partial sums, scaled at the end) ---------------------------
    d = q - pos_t
    comp_acc_ref[...] += jnp.sum(jnp.sum(d * d, axis=0, keepdims=True),
                                 axis=1, keepdims=True)
    dpos = d + 1e-6
    dp = jnp.sqrt(jnp.sum(dpos * dpos, axis=0, keepdims=True))   # (1, TN)
    dneg = q - neg_t + 1e-6
    dn = jnp.sqrt(jnp.sum(dneg * dneg, axis=0, keepdims=True))
    trip = jnp.maximum(dp - dn + 1.0, 0.0)
    sep_acc_ref[...] += jnp.sum(trip, axis=1, keepdims=True)

    # ---- update(): accumulate unnormalized query_update and running stats --
    w_un = (onehot1 * e0).astype(bf16)                           # (M, TN)
    um_ref[...] += lax.dot_general(w_un, q_bf, (((1,), (1,)), ((), ())),
                                   preferred_element_type=f32)   # (M, D)
    ssq_den_ref[...] += jnp.sum(e0, axis=1, keepdims=True)
    emax_ref[...] = jnp.maximum(emax_ref[...],
                                jnp.max(e0, axis=1, keepdims=True))

    # ---- finalize on the last N-tile ----------------------------------------
    @pl.when(i == last)
    def _finalize():
        # weights[n, m] = ssq[n, m] / max_n ssq[:, m]  ==  e0 / max_n e0
        q_update = um_ref[...] * pl.reciprocal(emax_ref[...], approx=True)
        new_mem = q_update + keys
        inv_m = lax.rsqrt(jnp.maximum(
            jnp.sum(new_mem * new_mem, axis=1, keepdims=True), 1e-24))
        um_ref[...] = new_mem * inv_m
        loss_ref[0] = sep_acc_ref[0, 0] * (1.0 / n_total)            # triplet
        loss_ref[1] = comp_acc_ref[0, 0] * (1.0 / (n_total * D))     # MSE


@functools.partial(jax.jit, static_argnames=("block_n",))
def memory_forward(query_nchw, keys, block_n=128):
    """Equivalent of Memory.forward(query, keys, train=True)."""
    B, D, H, W = query_nchw.shape
    M, D_k = keys.shape
    assert D_k == D and D % 8 == 0
    N = B * H * W
    assert N % block_n == 0, "B*H*W must be a multiple of block_n"
    num_tiles = N // block_n

    # Layout glue: NCHW -> (D, N) with n = b*H*W + h*W + w (matches the
    # PyTorch permute(0,2,3,1).view(bs*h*w, d) flattening, transposed).
    q_t = jnp.transpose(query_nchw, (1, 0, 2, 3)).reshape(D, N).astype(jnp.float32)
    keys_f = keys.astype(jnp.float32)
    keys_t = jnp.transpose(keys_f)                      # (D, M), no in-kernel transpose

    kernel = functools.partial(_memory_kernel, n_total=N)

    grid_spec = pltpu.PrefetchScalarGridSpec(
        num_scalar_prefetch=0,
        grid=(num_tiles,),
        in_specs=[
            pl.BlockSpec((D, block_n), lambda i: (0, i)),    # query tile (lane = N)
            pl.BlockSpec((M, D), lambda i: (0, 0)),          # keys
            pl.BlockSpec((D, M), lambda i: (0, 0)),          # keys^T
        ],
        out_specs=(
            pl.BlockSpec((2 * D, block_n), lambda i: (0, i)),   # updated_query^T
            pl.BlockSpec((M, D), lambda i: (0, 0)),             # updated_memory
            pl.BlockSpec((M, block_n), lambda i: (0, i)),       # ssq numerator (exp)
            pl.BlockSpec((M, 1), lambda i: (0, 0)),             # ssq denominator
            pl.BlockSpec((M, block_n), lambda i: (0, i)),       # softmax_score_memory
            pl.BlockSpec(memory_space=pltpu.MemorySpace.SMEM),  # (sep, comp) losses
        ),
        scratch_shapes=[
            pltpu.VMEM((M, 1), jnp.float32),   # running max_n exp(score - c)
            pltpu.VMEM((1, 1), jnp.float32),   # separateness-loss partial sum
            pltpu.VMEM((1, 1), jnp.float32),   # compactness-loss partial sum
        ],
    )

    out_shapes = (
        jax.ShapeDtypeStruct((2 * D, N), jnp.float32),
        jax.ShapeDtypeStruct((M, D), jnp.float32),
        jax.ShapeDtypeStruct((M, N), jnp.float32),
        jax.ShapeDtypeStruct((M, 1), jnp.float32),
        jax.ShapeDtypeStruct((M, N), jnp.float32),
        jax.ShapeDtypeStruct((2,), jnp.float32),
    )

    cost = pl.CostEstimate(
        flops=10 * M * D * N + 60 * M * N + 30 * D * N,
        transcendentals=2 * M * N + 4 * N + 4 * M,
        bytes_accessed=4 * (3 * D * N + 3 * M * D + 2 * M * N + M + 2),
    )

    uq_t, um, ssq_num, ssq_den, ssm_t, losses = pl.pallas_call(
        kernel,
        out_shape=out_shapes,
        grid_spec=grid_spec,
        compiler_params=pltpu.CompilerParams(
            # Resident accumulators (um / ssq_den / losses) -> sequential grid.
            dimension_semantics=("arbitrary",),
        ),
        cost_estimate=cost,
    )(q_t, keys_f, keys_t)

    updated_query = jnp.transpose(uq_t.reshape(2 * D, B, H, W), (1, 0, 2, 3))
    softmax_score_query = jnp.transpose(ssq_num / ssq_den)   # (N, M)
    softmax_score_memory = jnp.transpose(ssm_t)              # (N, M)
    return (updated_query, um, softmax_score_query, softmax_score_memory,
            losses[0], losses[1])


if __name__ == "__main__":
    # Shapes consistent with Memory(memory_size=10, feature_dim=32, key_dim=32, ...)
    B, D, H, W = 2, 32, 16, 16
    M = 10  # memory_size

    key = jax.random.PRNGKey(0)
    k_q, k_m = jax.random.split(key)

    query = jax.random.normal(k_q, (B, D, H, W), dtype=jnp.float32)
    # Deterministic "memory items" parameter: row-normalized random init.
    keys_raw = jax.random.normal(k_m, (M, D), dtype=jnp.float32)
    keys = keys_raw / jnp.maximum(
        jnp.linalg.norm(keys_raw, axis=1, keepdims=True), 1e-12)

    outs = jax.block_until_ready(memory_forward(query, keys))
    updated_query, updated_memory, ssq, ssm, sep_loss, comp_loss = outs

    N = B * H * W
    assert updated_query.shape == (B, 2 * D, H, W)
    assert updated_memory.shape == (M, D)
    assert ssq.shape == (N, M) and ssm.shape == (N, M)
    assert bool(jnp.isfinite(sep_loss)) and bool(jnp.isfinite(comp_loss))

    print("KERNEL_OK")
</pallas_src>

<mosaic_0001>
module attributes {stable_mosaic.version = 11 : i64} {
  func.func @_memory_kernel(%arg0: i32, %arg1: memref<32x128xf32, #tpu.memory_space<vmem>>, %arg2: memref<10x32xf32, #tpu.memory_space<vmem>>, %arg3: memref<32x10xf32, #tpu.memory_space<vmem>>, %arg4: memref<64x128xf32, #tpu.memory_space<vmem>>, %arg5: memref<10x32xf32, #tpu.memory_space<vmem>>, %arg6: memref<10x128xf32, #tpu.memory_space<vmem>>, %arg7: memref<10x1xf32, #tpu.memory_space<vmem>>, %arg8: memref<10x128xf32, #tpu.memory_space<vmem>>, %arg9: memref<2xf32, #tpu.memory_space<smem>>, %arg10: memref<10x1xf32, #tpu.memory_space<vmem>>, %arg11: memref<1x1xf32, #tpu.memory_space<vmem>>, %arg12: memref<1x1xf32, #tpu.memory_space<vmem>>) attributes {dimension_semantics = [#tpu.dimension_semantics<arbitrary>], iteration_bounds = array<i64: 4>, scalar_prefetch = 0 : i64, scratch_operands = 3 : i64, tpu.core_type = #tpu.core_type<tc>, window_params = [{transform_indices = @transform_0, window_bounds = array<i64: 32, 128>}, {pipeline_mode = #tpu.pipeline_mode<synchronous>, transform_indices = @transform_1, window_bounds = array<i64: 10, 32>}, {pipeline_mode = #tpu.pipeline_mode<synchronous>, transform_indices = @transform_2, window_bounds = array<i64: 32, 10>}, {transform_indices = @transform_3, window_bounds = array<i64: 64, 128>}, {pipeline_mode = #tpu.pipeline_mode<synchronous>, transform_indices = @transform_4, window_bounds = array<i64: 10, 32>}, {transform_indices = @transform_5, window_bounds = array<i64: 10, 128>}, {pipeline_mode = #tpu.pipeline_mode<synchronous>, transform_indices = @transform_6, window_bounds = array<i64: 10, 1>}, {transform_indices = @transform_7, window_bounds = array<i64: 10, 128>}, {transform_indices = @transform_8, window_bounds = array<i64: 2>}]} {
    %c0_i32 = arith.constant 0 : i32
    %0 = arith.cmpi eq, %arg0, %c0_i32 : i32
    %1 = arith.extui %0 : i1 to i32
    %c0_i32_0 = arith.constant 0 : i32
    %2 = arith.cmpi ne, %1, %c0_i32_0 : i32
    scf.if %2 {
      %cst_57 = arith.constant 0.000000e+00 : f32
      %123 = vector.broadcast %cst_57 : f32 to vector<10x32xf32>
      %c0_58 = arith.constant 0 : index
      %c0_59 = arith.constant 0 : index
      %124 = vector.load %arg5[%c0_58, %c0_59] : memref<10x32xf32, #tpu.memory_space<vmem>>, vector<10x32xf32>
      tpu.vector_store %arg5[%c0_58, %c0_59], %123 {strides = array<i32>} : memref<10x32xf32, #tpu.memory_space<vmem>>, vector<10x32xf32>,
      %cst_60 = arith.constant 0.000000e+00 : f32
      %125 = vector.broadcast %cst_60 : f32 to vector<10x1xf32>
      %c0_61 = arith.constant 0 : index
      %c0_62 = arith.constant 0 : index
      %126 = vector.load %arg7[%c0_61, %c0_62] : memref<10x1xf32, #tpu.memory_space<vmem>>, vector<10x1xf32>
      tpu.vector_store %arg7[%c0_61, %c0_62], %125 {strides = array<i32>} : memref<10x1xf32, #tpu.memory_space<vmem>>, vector<10x1xf32>,
      %cst_63 = arith.constant 0.000000e+00 : f32
      %127 = vector.broadcast %cst_63 : f32 to vector<10x1xf32>
      %c0_64 = arith.constant 0 : index
      %c0_65 = arith.constant 0 : index
      %128 = vector.load %arg10[%c0_64, %c0_65] : memref<10x1xf32, #tpu.memory_space<vmem>>, vector<10x1xf32>
      tpu.vector_store %arg10[%c0_64, %c0_65], %127 {strides = array<i32>} : memref<10x1xf32, #tpu.memory_space<vmem>>, vector<10x1xf32>,
      %cst_66 = arith.constant 0.000000e+00 : f32
      %129 = vector.broadcast %cst_66 : f32 to vector<1x1xf32>
      %c0_67 = arith.constant 0 : index
      %c0_68 = arith.constant 0 : index
      %130 = vector.load %arg11[%c0_67, %c0_68] : memref<1x1xf32, #tpu.memory_space<vmem>>, vector<1x1xf32>
      tpu.vector_store %arg11[%c0_67, %c0_68], %129 {strides = array<i32>} : memref<1x1xf32, #tpu.memory_space<vmem>>, vector<1x1xf32>,
      %cst_69 = arith.constant 0.000000e+00 : f32
      %131 = vector.broadcast %cst_69 : f32 to vector<1x1xf32>
      %c0_70 = arith.constant 0 : index
      %c0_71 = arith.constant 0 : index
      %132 = vector.load %arg12[%c0_70, %c0_71] : memref<1x1xf32, #tpu.memory_space<vmem>>, vector<1x1xf32>
      tpu.vector_store %arg12[%c0_70, %c0_71], %131 {strides = array<i32>} : memref<1x1xf32, #tpu.memory_space<vmem>>, vector<1x1xf32>,
    } else {
    }
    %c0 = arith.constant 0 : index
    %c0_1 = arith.constant 0 : index
    %3 = vector.load %arg2[%c0, %c0_1] : memref<10x32xf32, #tpu.memory_space<vmem>>, vector<10x32xf32>
    %c0_2 = arith.constant 0 : index
    %c0_3 = arith.constant 0 : index
    %4 = vector.load %arg1[%c0_2, %c0_3] : memref<32x128xf32, #tpu.memory_space<vmem>>, vector<32x128xf32>
    %5 = arith.mulf %4, %4 : vector<32x128xf32>
    %cst = arith.constant dense<0.000000e+00> : vector<128xf32>
    %6 = vector.multi_reduction <add>, %5, %cst [0] : vector<32x128xf32> to vector<128xf32>
    %7 = vector.shape_cast %6 : vector<128xf32> to vector<1x128xf32>
    %cst_4 = arith.constant 1.000000e-24 : f32
    %8 = vector.broadcast %cst_4 : f32 to vector<1x128xf32>
    %9 = arith.maximumf %7, %8 : vector<1x128xf32>
    %10 = math.rsqrt %9 : vector<1x128xf32>
    %11 = vector.broadcast %10 : vector<1x128xf32> to vector<32x128xf32>
    %12 = arith.mulf %4, %11 : vector<32x128xf32>
    %13 = arith.truncf %12 : vector<32x128xf32> to vector<32x128xbf16>
    %14 = arith.truncf %3 : vector<10x32xf32> to vector<10x32xbf16>
    %cst_5 = arith.constant dense<0.000000e+00> : vector<10x128xf32>
    %15 = tpu.matmul %14, %13, %cst_5 {dimension_numbers = #tpu.dot_dimension_numbers<[1], [0], [0], [1], [0, 0, 1, 1], [], []>} : vector<10x32xbf16>, vector<32x128xbf16>, vector<10x128xf32> -> vector<10x128xf32>
    %16 = arith.mulf %3, %3 : vector<10x32xf32>
    %cst_6 = arith.constant dense<0.000000e+00> : vector<10xf32>
    %17 = vector.multi_reduction <add>, %16, %cst_6 [1] : vector<10x32xf32> to vector<10xf32>
    %18 = vector.shape_cast %17 : vector<10xf32> to vector<10x1xf32>
    %19 = math.sqrt %18 : vector<10x1xf32>
    %20 = vector.broadcast %19 : vector<10x1xf32> to vector<10x128xf32>
    %21 = arith.subf %15, %20 : vector<10x128xf32>
    %22 = math.exp %21 : vector<10x128xf32>
    %c0_7 = arith.constant 0 : index
    %c0_8 = arith.constant 0 : index
    %23 = vector.load %arg6[%c0_7, %c0_8] : memref<10x128xf32, #tpu.memory_space<vmem>>, vector<10x128xf32>
    tpu.vector_store %arg6[%c0_7, %c0_8], %22 {strides = array<i32>} : memref<10x128xf32, #tpu.memory_space<vmem>>, vector<10x128xf32>,
    %cst_9 = arith.constant dense<0xFF800000> : vector<128xf32>
    %24 = vector.multi_reduction <maximumf>, %15, %cst_9 [0] : vector<10x128xf32> to vector<128xf32>
    %25 = vector.shape_cast %24 : vector<128xf32> to vector<1x128xf32>
    %26 = vector.broadcast %25 : vector<1x128xf32> to vector<10x128xf32>
    %27 = arith.subf %15, %26 : vector<10x128xf32>
    %28 = math.exp %27 : vector<10x128xf32>
    %cst_10 = arith.constant dense<0.000000e+00> : vector<128xf32>
    %29 = vector.multi_reduction <add>, %28, %cst_10 [0] : vector<10x128xf32> to vector<128xf32>
    %30 = vector.shape_cast %29 : vector<128xf32> to vector<1x128xf32>
    %31 = tpu.reciprocal %30 {approx = true} : vector<1x128xf32> -> vector<1x128xf32>
    %32 = vector.broadcast %31 : vector<1x128xf32> to vector<10x128xf32>
    %33 = arith.mulf %28, %32 : vector<10x128xf32>
    %c0_11 = arith.constant 0 : index
    %c0_12 = arith.constant 0 : index
    %34 = vector.load %arg8[%c0_11, %c0_12] : memref<10x128xf32, #tpu.memory_space<vmem>>, vector<10x128xf32>
    tpu.vector_store %arg8[%c0_11, %c0_12], %33 {strides = array<i32>} : memref<10x128xf32, #tpu.memory_space<vmem>>, vector<10x128xf32>,
    %35 = tpu.iota {dimensions = array<i32: 0>} : vector<10x128xi32>
    %36 = vector.broadcast %25 : vector<1x128xf32> to vector<10x128xf32>
    %37 = arith.cmpf oge, %15, %36 : vector<10x128xf32>
    %c10_i32 = arith.constant 10 : i32
    %38 = vector.broadcast %c10_i32 : i32 to vector<10x128xi32>
    %39 = arith.select %37, %35, %38 : vector<10x128xi1>, vector<10x128xi32>
    %cst_13 = arith.constant dense<2147483647> : vector<128xi32>
    %40 = vector.multi_reduction <minsi>, %39, %cst_13 [0] : vector<10x128xi32> to vector<128xi32>
    %41 = vector.shape_cast %40 : vector<128xi32> to vector<1x128xi32>
    %42 = vector.broadcast %41 : vector<1x128xi32> to vector<10x128xi32>
    %43 = arith.cmpi eq, %35, %42 : vector<10x128xi32>
    %44 = arith.extui %43 : vector<10x128xi1> to vector<10x128xi32>
    %45 = arith.sitofp %44 : vector<10x128xi32> to vector<10x128xf32>
    %46 = vector.broadcast %41 : vector<1x128xi32> to vector<10x128xi32>
    %47 = arith.cmpi eq, %35, %46 : vector<10x128xi32>
    %cst_14 = arith.constant 0xFF800000 : f32
    %48 = vector.broadcast %cst_14 : f32 to vector<10x128xf32>
    %49 = arith.select %47, %48, %15 : vector<10x128xi1>, vector<10x128xf32>
    %cst_15 = arith.constant dense<0xFF800000> : vector<128xf32>
    %50 = vector.multi_reduction <maximumf>, %49, %cst_15 [0] : vector<10x128xf32> to vector<128xf32>
    %51 = vector.shape_cast %50 : vector<128xf32> to vector<1x128xf32>
    %52 = vector.broadcast %51 : vector<1x128xf32> to vector<10x128xf32>
    %53 = arith.cmpf oge, %49, %52 : vector<10x128xf32>
    %c10_i32_16 = arith.constant 10 : i32
    %54 = vector.broadcast %c10_i32_16 : i32 to vector<10x128xi32>
    %55 = arith.select %53, %35, %54 : vector<10x128xi1>, vector<10x128xi32>
    %cst_17 = arith.constant dense<2147483647> : vector<128xi32>
    %56 = vector.multi_reduction <minsi>, %55, %cst_17 [0] : vector<10x128xi32> to vector<128xi32>
    %57 = vector.shape_cast %56 : vector<128xi32> to vector<1x128xi32>
    %58 = vector.broadcast %57 : vector<1x128xi32> to vector<10x128xi32>
    %59 = arith.cmpi eq, %35, %58 : vector<10x128xi32>
    %60 = arith.extui %59 : vector<10x128xi1> to vector<10x128xi32>
    %61 = arith.sitofp %60 : vector<10x128xi32> to vector<10x128xf32>
    %62 = tpu.concatenate %45, %61, %33 in 1 : vector<10x128xf32>, vector<10x128xf32>, vector<10x128xf32> -> vector<10x384xf32>
    %63 = arith.truncf %62 : vector<10x384xf32> to vector<10x384xbf16>
    %c0_18 = arith.constant 0 : index
    %c0_19 = arith.constant 0 : index
    %64 = vector.load %arg3[%c0_18, %c0_19] : memref<32x10xf32, #tpu.memory_space<vmem>>, vector<32x10xf32>
    %65 = arith.truncf %64 : vector<32x10xf32> to vector<32x10xbf16>
    %cst_20 = arith.constant dense<0.000000e+00> : vector<32x384xf32>
    %66 = tpu.matmul %65, %63, %cst_20 {dimension_numbers = #tpu.dot_dimension_numbers<[1], [0], [0], [1], [0, 0, 1, 1], [], []>} : vector<32x10xbf16>, vector<10x384xbf16>, vector<32x384xf32> -> vector<32x384xf32>
    %67 = vector.extract_strided_slice %66 {offsets = [0, 0], sizes = [32, 128], strides = [1, 1]} : vector<32x384xf32> to vector<32x128xf32>
    %68 = vector.extract_strided_slice %66 {offsets = [0, 128], sizes = [32, 128], strides = [1, 1]} : vector<32x384xf32> to vector<32x128xf32>
    %69 = vector.extract_strided_slice %66 {offsets = [0, 256], sizes = [32, 128], strides = [1, 1]} : vector<32x384xf32> to vector<32x128xf32>
    %c0_21 = arith.constant 0 : index
    %c0_22 = arith.constant 0 : index
    %70 = vector.load %arg4[%c0_21, %c0_22] : memref<64x128xf32, #tpu.memory_space<vmem>>, vector<32x128xf32>
    tpu.vector_store %arg4[%c0_21, %c0_22], %12 {strides = array<i32>} : memref<64x128xf32, #tpu.memory_space<vmem>>, vector<32x128xf32>,
    %c32 = arith.constant 32 : index
    %c0_23 = arith.constant 0 : index
    %71 = vector.load %arg4[%c32, %c0_23] : memref<64x128xf32, #tpu.memory_space<vmem>>, vector<32x128xf32>
    tpu.vector_store %arg4[%c32, %c0_23], %69 {strides = array<i32>} : memref<64x128xf32, #tpu.memory_space<vmem>>, vector<32x128xf32>,
    %72 = arith.subf %12, %67 : vector<32x128xf32>
    %c0_24 = arith.constant 0 : index
    %c0_25 = arith.constant 0 : index
    %73 = vector.load %arg12[%c0_24, %c0_25] : memref<1x1xf32, #tpu.memory_space<vmem>>, vector<1x1xf32>
    %74 = arith.mulf %72, %72 : vector<32x128xf32>
    %cst_26 = arith.constant dense<0.000000e+00> : vector<128xf32>
    %75 = vector.multi_reduction <add>, %74, %cst_26 [0] : vector<32x128xf32> to vector<128xf32>
    %76 = vector.shape_cast %75 : vector<128xf32> to vector<1x128xf32>
    %cst_27 = arith.constant dense<0.000000e+00> : vector<1xf32>
    %77 = vector.multi_reduction <add>, %76, %cst_27 [1] : vector<1x128xf32> to vector<1xf32>
    %78 = vector.shape_cast %77 : vector<1xf32> to vector<1x1xf32>
    %79 = arith.addf %73, %78 : vector<1x1xf32>
    %c0_28 = arith.constant 0 : index
    %c0_29 = arith.constant 0 : index
    %80 = vector.load %arg12[%c0_28, %c0_29] : memref<1x1xf32, #tpu.memory_space<vmem>>, vector<1x1xf32>
    tpu.vector_store %arg12[%c0_28, %c0_29], %79 {strides = array<i32>} : memref<1x1xf32, #tpu.memory_space<vmem>>, vector<1x1xf32>,
    %cst_30 = arith.constant 9.99999997E-7 : f32
    %81 = vector.broadcast %cst_30 : f32 to vector<32x128xf32>
    %82 = arith.addf %72, %81 : vector<32x128xf32>
    %83 = arith.mulf %82, %82 : vector<32x128xf32>
    %cst_31 = arith.constant dense<0.000000e+00> : vector<128xf32>
    %84 = vector.multi_reduction <add>, %83, %cst_31 [0] : vector<32x128xf32> to vector<128xf32>
    %85 = vector.shape_cast %84 : vector<128xf32> to vector<1x128xf32>
    %86 = math.sqrt %85 : vector<1x128xf32>
    %87 = arith.subf %12, %68 : vector<32x128xf32>
    %cst_32 = arith.constant 9.99999997E-7 : f32
    %88 = vector.broadcast %cst_32 : f32 to vector<32x128xf32>
    %89 = arith.addf %87, %88 : vector<32x128xf32>
    %90 = arith.mulf %89, %89 : vector<32x128xf32>
    %cst_33 = arith.constant dense<0.000000e+00> : vector<128xf32>
    %91 = vector.multi_reduction <add>, %90, %cst_33 [0] : vector<32x128xf32> to vector<128xf32>
    %92 = vector.shape_cast %91 : vector<128xf32> to vector<1x128xf32>
    %93 = math.sqrt %92 : vector<1x128xf32>
    %94 = arith.subf %86, %93 : vector<1x128xf32>
    %cst_34 = arith.constant 1.000000e+00 : f32
    %95 = vector.broadcast %cst_34 : f32 to vector<1x128xf32>
    %96 = arith.addf %94, %95 : vector<1x128xf32>
    %cst_35 = arith.constant 0.000000e+00 : f32
    %97 = vector.broadcast %cst_35 : f32 to vector<1x128xf32>
    %98 = arith.maximumf %96, %97 : vector<1x128xf32>
    %c0_36 = arith.constant 0 : index
    %c0_37 = arith.constant 0 : index
    %99 = vector.load %arg11[%c0_36, %c0_37] : memref<1x1xf32, #tpu.memory_space<vmem>>, vector<1x1xf32>
    %cst_38 = arith.constant dense<0.000000e+00> : vector<1xf32>
    %100 = vector.multi_reduction <add>, %98, %cst_38 [1] : vector<1x128xf32> to vector<1xf32>
    %101 = vector.shape_cast %100 : vector<1xf32> to vector<1x1xf32>
    %102 = arith.addf %99, %101 : vector<1x1xf32>
    %c0_39 = arith.constant 0 : index
    %c0_40 = arith.constant 0 : index
    %103 = vector.load %arg11[%c0_39, %c0_40] : memref<1x1xf32, #tpu.memory_space<vmem>>, vector<1x1xf32>
    tpu.vector_store %arg11[%c0_39, %c0_40], %102 {strides = array<i32>} : memref<1x1xf32, #tpu.memory_space<vmem>>, vector<1x1xf32>,
    %104 = arith.mulf %45, %22 : vector<10x128xf32>
    %105 = arith.truncf %104 : vector<10x128xf32> to vector<10x128xbf16>
    %c0_41 = arith.constant 0 : index
    %c0_42 = arith.constant 0 : index
    %106 = vector.load %arg5[%c0_41, %c0_42] : memref<10x32xf32, #tpu.memory_space<vmem>>, vector<10x32xf32>
    %cst_43 = arith.constant dense<0.000000e+00> : vector<10x32xf32>
    %107 = tpu.matmul %105, %13, %cst_43 {dimension_numbers = #tpu.dot_dimension_numbers<[1], [1], [0], [0], [0, 0, 1, 0], [], []>} : vector<10x128xbf16>, vector<32x128xbf16>, vector<10x32xf32> -> vector<10x32xf32>
    %108 = arith.addf %106, %107 : vector<10x32xf32>
    %c0_44 = arith.constant 0 : index
    %c0_45 = arith.constant 0 : index
    %109 = vector.load %arg5[%c0_44, %c0_45] : memref<10x32xf32, #tpu.memory_space<vmem>>, vector<10x32xf32>
    tpu.vector_store %arg5[%c0_44, %c0_45], %108 {strides = array<i32>} : memref<10x32xf32, #tpu.memory_space<vmem>>, vector<10x32xf32>,
    %c0_46 = arith.constant 0 : index
    %c0_47 = arith.constant 0 : index
    %110 = vector.load %arg7[%c0_46, %c0_47] : memref<10x1xf32, #tpu.memory_space<vmem>>, vector<10x1xf32>
    %cst_48 = arith.constant dense<0.000000e+00> : vector<10xf32>
    %111 = vector.multi_reduction <add>, %22, %cst_48 [1] : vector<10x128xf32> to vector<10xf32>
    %112 = vector.shape_cast %111 : vector<10xf32> to vector<10x1xf32>
    %113 = arith.addf %110, %112 : vector<10x1xf32>
    %c0_49 = arith.constant 0 : index
    %c0_50 = arith.constant 0 : index
    %114 = vector.load %arg7[%c0_49, %c0_50] : memref<10x1xf32, #tpu.memory_space<vmem>>, vector<10x1xf32>
    tpu.vector_store %arg7[%c0_49, %c0_50], %113 {strides = array<i32>} : memref<10x1xf32, #tpu.memory_space<vmem>>, vector<10x1xf32>,
    %c0_51 = arith.constant 0 : index
    %c0_52 = arith.constant 0 : index
    %115 = vector.load %arg10[%c0_51, %c0_52] : memref<10x1xf32, #tpu.memory_space<vmem>>, vector<10x1xf32>
    %cst_53 = arith.constant dense<0xFF800000> : vector<10xf32>
    %116 = vector.multi_reduction <maximumf>, %22, %cst_53 [1] : vector<10x128xf32> to vector<10xf32>
    %117 = vector.shape_cast %116 : vector<10xf32> to vector<10x1xf32>
    %118 = arith.maximumf %115, %117 : vector<10x1xf32>
    %c0_54 = arith.constant 0 : index
    %c0_55 = arith.constant 0 : index
    %119 = vector.load %arg10[%c0_54, %c0_55] : memref<10x1xf32, #tpu.memory_space<vmem>>, vector<10x1xf32>
    tpu.vector_store %arg10[%c0_54, %c0_55], %118 {strides = array<i32>} : memref<10x1xf32, #tpu.memory_space<vmem>>, vector<10x1xf32>,
    %c3_i32 = arith.constant 3 : i32
    %120 = arith.cmpi eq, %arg0, %c3_i32 : i32
    %121 = arith.extui %120 : i1 to i32
    %c0_i32_56 = arith.constant 0 : i32
    %122 = arith.cmpi ne, %121, %c0_i32_56 : i32
    scf.if %122 {
      %c0_57 = arith.constant 0 : index
      %c0_58 = arith.constant 0 : index
      %123 = vector.load %arg5[%c0_57, %c0_58] : memref<10x32xf32, #tpu.memory_space<vmem>>, vector<10x32xf32>
      %c0_59 = arith.constant 0 : index
      %c0_60 = arith.constant 0 : index
      %124 = vector.load %arg10[%c0_59, %c0_60] : memref<10x1xf32, #tpu.memory_space<vmem>>, vector<10x1xf32>
      %125 = tpu.reciprocal %124 {approx = true} : vector<10x1xf32> -> vector<10x1xf32>
      %126 = vector.broadcast %125 : vector<10x1xf32> to vector<10x32xf32>
      %127 = arith.mulf %123, %126 : vector<10x32xf32>
      %128 = arith.addf %127, %3 : vector<10x32xf32>
      %129 = arith.mulf %128, %128 : vector<10x32xf32>
      %cst_61 = arith.constant dense<0.000000e+00> : vector<10xf32>
      %130 = vector.multi_reduction <add>, %129, %cst_61 [1] : vector<10x32xf32> to vector<10xf32>
      %131 = vector.shape_cast %130 : vector<10xf32> to vector<10x1xf32>
      %cst_62 = arith.constant 1.000000e-24 : f32
      %132 = vector.broadcast %cst_62 : f32 to vector<10x1xf32>
      %133 = arith.maximumf %131, %132 : vector<10x1xf32>
      %134 = math.rsqrt %133 : vector<10x1xf32>
      %135 = vector.broadcast %134 : vector<10x1xf32> to vector<10x32xf32>
      %136 = arith.mulf %128, %135 : vector<10x32xf32>
      %c0_63 = arith.constant 0 : index
      %c0_64 = arith.constant 0 : index
      %137 = vector.load %arg5[%c0_63, %c0_64] : memref<10x32xf32, #tpu.memory_space<vmem>>, vector<10x32xf32>
      tpu.vector_store %arg5[%c0_63, %c0_64], %136 {strides = array<i32>} : memref<10x32xf32, #tpu.memory_space<vmem>>, vector<10x32xf32>,
      %c0_65 = arith.constant 0 : index
      %c0_66 = arith.constant 0 : index
      %138 = vector.load %arg11[%c0_65, %c0_66] : memref<1x1xf32, #tpu.memory_space<vmem>>, vector<1x1xf32>
      %139 = vector.extract %138[0, 0] : f32 from vector<1x1xf32>
      %cst_67 = arith.constant 0.001953125 : f32
      %140 = arith.mulf %139, %cst_67 : f32
      %c0_68 = arith.constant 0 : index
      %141 = memref.load %arg9[%c0_68] : memref<2xf32, #tpu.memory_space<smem>>
      memref.store %140, %arg9[%c0_68] : memref<2xf32, #tpu.memory_space<smem>>
      %c0_69 = arith.constant 0 : index
      %c0_70 = arith.constant 0 : index
      %142 = vector.load %arg12[%c0_69, %c0_70] : memref<1x1xf32, #tpu.memory_space<vmem>>, vector<1x1xf32>
      %143 = vector.extract %142[0, 0] : f32 from vector<1x1xf32>
      %cst_71 = arith.constant 6.10351563E-5 : f32
      %144 = arith.mulf %143, %cst_71 : f32
      %c1 = arith.constant 1 : index
      %145 = memref.load %arg9[%c1] : memref<2xf32, #tpu.memory_space<smem>>
      memref.store %144, %arg9[%c1] : memref<2xf32, #tpu.memory_space<smem>>
    } else {
    }
    return
  }
  func.func @transform_0(%arg0: i32) -> (i32, i32) {
    %c0_i32 = arith.constant 0 : i32
    %c0_i32_0 = arith.constant 0 : i32
    return %c0_i32, %arg0 : i32, i32
  }
  func.func @transform_1(%arg0: i32) -> (i32, i32) {
    %c0_i32 = arith.constant 0 : i32
    %c0_i32_0 = arith.constant 0 : i32
    %c0_i32_1 = arith.constant 0 : i32
    return %c0_i32, %c0_i32_0 : i32, i32
  }
  func.func @transform_2(%arg0: i32) -> (i32, i32) {
    %c0_i32 = arith.constant 0 : i32
    %c0_i32_0 = arith.constant 0 : i32
    %c0_i32_1 = arith.constant 0 : i32
    return %c0_i32, %c0_i32_0 : i32, i32
  }
  func.func @transform_3(%arg0: i32) -> (i32, i32) {
    %c0_i32 = arith.constant 0 : i32
    %c0_i32_0 = arith.constant 0 : i32
    return %c0_i32, %arg0 : i32, i32
  }
  func.func @transform_4(%arg0: i32) -> (i32, i32) {
    %c0_i32 = arith.constant 0 : i32
    %c0_i32_0 = arith.constant 0 : i32
    %c0_i32_1 = arith.constant 0 : i32
    return %c0_i32, %c0_i32_0 : i32, i32
  }
  func.func @transform_5(%arg0: i32) -> (i32, i32) {
    %c0_i32 = arith.constant 0 : i32
    %c0_i32_0 = arith.constant 0 : i32
    return %c0_i32, %arg0 : i32, i32
  }
  func.func @transform_6(%arg0: i32) -> (i32, i32) {
    %c0_i32 = arith.constant 0 : i32
    %c0_i32_0 = arith.constant 0 : i32
    %c0_i32_1 = arith.constant 0 : i32
    return %c0_i32, %c0_i32_0 : i32, i32
  }
  func.func @transform_7(%arg0: i32) -> (i32, i32) {
    %c0_i32 = arith.constant 0 : i32
    %c0_i32_0 = arith.constant 0 : i32
    return %c0_i32, %arg0 : i32, i32
  }
  func.func @transform_8(%arg0: i32) -> i32 {
    %c0_i32 = arith.constant 0 : i32
    %c0_i32_0 = arith.constant 0 : i32
    return %c0_i32 : i32
  }
}

</mosaic_0001>

<llo_original>
// kernel: memory_forward.1
$region0: #{memory_forward.1}
  #allocation0 [shape = 'u32[]', space=smem, size = 0x4, offset = 0x4, fixed_abs, tag = 'smem constant byte address 0x4 - core index']
  #allocation1 [shape = 'u32[144,128]{1,0:T(1,128)}', space=vmem, size = 0x12000, scoped, tag = 'internal scratch']
  #allocation2 [shape = 'f32[10,1]{1,0:T(8,128)}', space=vmem, size = 0x2000, scoped, tag = 'scratch operand']
  #allocation3 [shape = 'f32[1,1]{1,0:T(1,128)}', space=vmem, size = 0x200, scoped, tag = 'scratch operand']
  #allocation4 [shape = 'f32[1,1]{1,0:T(1,128)}', space=vmem, size = 0x200, scoped, tag = 'scratch operand']
  %s0 = inlined_call_operand.vmem [shape: f32[32,512], index: 0, kind: input, shape index: {}]
  %s1 = inlined_call_operand.vmem [shape: f32[10,32], index: 1, kind: input, shape index: {}]
  %s2 = inlined_call_operand.vmem [shape: f32[32,10], index: 2, kind: input, shape index: {}]
  %s3 = inlined_call_operand.vmem [shape: f32[64,512], index: 3, kind: output, shape index: {0}]
  %s4 = inlined_call_operand.hbm [shape: f32[10,32], index: 4, kind: output, shape index: {1}]
  %s5 = inlined_call_operand.vmem [shape: f32[10,512], index: 5, kind: output, shape index: {2}]
  %s6 = inlined_call_operand.vmem [shape: f32[10,1], index: 6, kind: output, shape index: {3}]
  %s7 = inlined_call_operand.hbm [shape: f32[10,512], index: 7, kind: output, shape index: {4}]
  %s8 = inlined_call_operand.vmem [shape: f32[2], index: 8, kind: output, shape index: {5}]
  %9 = xla_tuple %s3, %s4, %s5, %s6, %s7, %s8
  %s10 = sld [smem:[#allocation0]]
  $region199: #{memory_forward.1} parent=0
    _
  %s12 = ssub.s32 1, %s10
  %s13 = scalar_select 0, %s12, %s10
  $region1: #{memory_forward.1} parent=0
    #allocation5 [shape = 'u8[32768]{0}', space=vmem, size = 0x8000, scoped, tag = 'input window, operand 0']
    #allocation6 [shape = 'u8[65536]{0}', space=vmem, size = 0x10000, scoped, tag = 'output window, operand 0']
    #allocation7 [shape = 'u8[8192]{0}', space=vmem, size = 0x2000, scoped, tag = 'output window, operand 1, single buffered']
    #allocation8 [shape = 's32[2]{0}', space=sflag, size = 0x8, scoped, tag = 'scoped memory for memory_forward.1']
    #allocation9 [shape = 's32[2]{0}', space=sflag, size = 0x8, scoped, tag = 'scoped memory for memory_forward.1']
    #allocation10 [shape = 'u8[16384]{0}', space=vmem, size = 0x4000, scoped, tag = 'output window, operand 2']
    #allocation11 [shape = 'u8[16384]{0}', space=vmem, size = 0x4000, scoped, tag = 'output window, operand 4']
    #allocation12 [shape = 's32[2]{0}', space=sflag, size = 0x8, scoped, tag = 'scoped memory for memory_forward.1']
    #allocation13 [shape = 'u8[512]{0}', space=smem, size = 0x200, scoped, tag = 'output window, operand 5, single buffered']
    %14 = vsyncpa [#allocation8], 0
    %15 = vsyncpa [#allocation12], 0
    %s16 = scalar_lea.sflag [#allocation12], 1
    %17 = vsyncpa %s16, 0
    %18 = vsyncpa [#allocation9], 0
    loop: start=0, step=1, limit=6
    $region2: #{memory_forward.1} parent=1 // loop_pre_header
      _
    $region3: #{memory_forward.1} parent=1 // loop_header
      %s20 = sphi 0, %s24
      %p21 = scmp.ge.s32.totalorder %s20, 6
      %s30 = sphi 0, %s32
      %s33 = sphi 0, %s30
      %s34 = sphi 0, %s33
      %s50 = sphi 0, %s34
      %s54 = sphi 0, %s54
      %s56 = sphi 0, %s54
      %s57 = sphi 0, %s56
      %s71 = sphi 0, %s57
      %s75 = sphi 0, %s75
      %s77 = sphi 0, %s75
      %s78 = sphi 0, %s77
      %s92 = sphi 0, %s78
      %s98 = sphi 0, %s100
      %s101 = sphi 0, %s98
      %s102 = sphi 0, %s101
      %s118 = sphi 0, %s102
      %s122 = sphi 0, %s122
      %s124 = sphi 0, %s122
      %s125 = sphi 0, %s124
      %s139 = sphi 0, %s125
      %s145 = sphi 0, %s147
      %s148 = sphi 0, %s145
      %s149 = sphi 0, %s148
      %s165 = sphi 0, %s149
      %s169 = sphi 0, %s169
      %s171 = sphi 0, %s169
      %s172 = sphi 0, %s171
      %s186 = sphi 0, %s172
      %s192 = sphi 0, %s194
      %s195 = sphi 0, %s192
      %s196 = sphi 0, %s195
      %s212 = sphi 0, %s196
      %s216 = sphi 0, %s216
      %s218 = sphi 0, %s216
      %s219 = sphi 0, %s218
      %s233 = sphi 0, %s219
    $region4: #{memory_forward.1} parent=1 // loop_header_branch
      %23 = sbr.rel (%p21) target = $region8
    $region5: #{memory_forward.1} parent=1 // loop_body
      %s25 = ssub.s32 %s20, 1
      %s26 = ssub.s32 %s20, 2
      %s27 = sadd.s32 %s20, 1
      %s28 = ssub.s32 %s20, %s27
      %p29 = scmp.eq.s32.totalorder %s28, 0
      %s31 = sadd.s32 %s30, 1
      %s32 = scalar_select %p29, %s30, %s31
      %p35 = pneg %p29
      %p36 = scmp.eq.s32.totalorder %s20, 3
      %p37 = por %p35, %p36
      %p38 = scmp.ne.s32.totalorder %s30, %s33
      %p39 = scmp.eq.s32.totalorder %s20, 0
      %p40 = por %p38, %p39
      %p41 = scmp.ne.s32.totalorder %s30, %s33
      %p42 = scmp.eq.s32.totalorder %s25, 3
      %p43 = por %p41, %p42
      %p44 = scmp.ne.s32.totalorder %s33, %s34
      %p45 = scmp.eq.s32.totalorder %s25, 0
      %p46 = por %p44, %p45
      %p47 = scmp.ne.s32.totalorder %s33, %s34
      %p48 = scmp.eq.s32.totalorder %s26, 3
      %p49 = por %p47, %p48
      %p51 = scmp.ne.s32.totalorder %s34, %s50
      %p52 = scmp.eq.s32.totalorder %s26, 0
      %p53 = por %p51, %p52
      %s55 = sadd.s32 %s54, 1
      %p58 = scmp.eq.s32.totalorder %s20, 3
      %p59 = scmp.ne.s32.totalorder %s54, %s56
      %p60 = scmp.eq.s32.totalorder %s20, 0
      %p61 = por %p59, %p60
      %p62 = scmp.ne.s32.totalorder %s54, %s56
      %p63 = scmp.eq.s32.totalorder %s25, 3
      %p64 = por %p62, %p63
      %p65 = scmp.ne.s32.totalorder %s56, %s57
      %p66 = scmp.eq.s32.totalorder %s25, 0
      %p67 = por %p65, %p66
      %p68 = scmp.ne.s32.totalorder %s56, %s57
      %p69 = scmp.eq.s32.totalorder %s26, 3
      %p70 = por %p68, %p69
      %p72 = scmp.ne.s32.totalorder %s57, %s71
      %p73 = scmp.eq.s32.totalorder %s26, 0
      %p74 = por %p72, %p73
      %s76 = sadd.s32 %s75, 1
      %p79 = scmp.eq.s32.totalorder %s20, 3
      %p80 = scmp.ne.s32.totalorder %s75, %s77
      %p81 = scmp.eq.s32.totalorder %s20, 0
      %p82 = por %p80, %p81
      %p83 = scmp.ne.s32.totalorder %s75, %s77
      %p84 = scmp.eq.s32.totalorder %s25, 3
      %p85 = por %p83, %p84
      %p86 = scmp.ne.s32.totalorder %s77, %s78
      %p87 = scmp.eq.s32.totalorder %s25, 0
      %p88 = por %p86, %p87
      %p89 = scmp.ne.s32.totalorder %s77, %s78
      %p90 = scmp.eq.s32.totalorder %s26, 3
      %p91 = por %p89, %p90
      %p93 = scmp.ne.s32.totalorder %s78, %s92
      %p94 = scmp.eq.s32.totalorder %s26, 0
      %p95 = por %p93, %p94
      %s96 = ssub.s32 %s20, %s27
      %p97 = scmp.eq.s32.totalorder %s96, 0
      %s99 = sadd.s32 %s98, 1
      %s100 = scalar_select %p97, %s98, %s99
      %p103 = pneg %p97
      %p104 = scmp.eq.s32.totalorder %s20, 3
      %p105 = por %p103, %p104
      %p106 = scmp.ne.s32.totalorder %s98, %s101
      %p107 = scmp.eq.s32.totalorder %s20, 0
      %p108 = por %p106, %p107
      %p109 = scmp.ne.s32.totalorder %s98, %s101
      %p110 = scmp.eq.s32.totalorder %s25, 3
      %p111 = por %p109, %p110
      %p112 = scmp.ne.s32.totalorder %s101, %s102
      %p113 = scmp.eq.s32.totalorder %s25, 0
      %p114 = por %p112, %p113
      %p115 = scmp.ne.s32.totalorder %s101, %s102
      %p116 = scmp.eq.s32.totalorder %s26, 3
      %p117 = por %p115, %p116
      %p119 = scmp.ne.s32.totalorder %s102, %s118
      %p120 = scmp.eq.s32.totalorder %s26, 0
      %p121 = por %p119, %p120
      %s123 = sadd.s32 %s122, 1
      %p126 = scmp.eq.s32.totalorder %s20, 3
      %p127 = scmp.ne.s32.totalorder %s122, %s124
      %p128 = scmp.eq.s32.totalorder %s20, 0
      %p129 = por %p127, %p128
      %p130 = scmp.ne.s32.totalorder %s122, %s124
      %p131 = scmp.eq.s32.totalorder %s25, 3
      %p132 = por %p130, %p131
      %p133 = scmp.ne.s32.totalorder %s124, %s125
      %p134 = scmp.eq.s32.totalorder %s25, 0
      %p135 = por %p133, %p134
      %p136 = scmp.ne.s32.totalorder %s124, %s125
      %p137 = scmp.eq.s32.totalorder %s26, 3
      %p138 = por %p136, %p137
      %p140 = scmp.ne.s32.totalorder %s125, %s139
      %p141 = scmp.eq.s32.totalorder %s26, 0
      %p142 = por %p140, %p141
      %s143 = ssub.s32 %s20, %s27
      %p144 = scmp.eq.s32.totalorder %s143, 0
      %s146 = sadd.s32 %s145, 1
      %s147 = scalar_select %p144, %s145, %s146
      %p150 = pneg %p144
      %p151 = scmp.eq.s32.totalorder %s20, 3
      %p152 = por %p150, %p151
      %p153 = scmp.ne.s32.totalorder %s145, %s148
      %p154 = scmp.eq.s32.totalorder %s20, 0
      %p155 = por %p153, %p154
      %p156 = scmp.ne.s32.totalorder %s145, %s148
      %p157 = scmp.eq.s32.totalorder %s25, 3
      %p158 = por %p156, %p157
      %p159 = scmp.ne.s32.totalorder %s148, %s149
      %p160 = scmp.eq.s32.totalorder %s25, 0
      %p161 = por %p159, %p160
      %p162 = scmp.ne.s32.totalorder %s148, %s149
      %p163 = scmp.eq.s32.totalorder %s26, 3
      %p164 = por %p162, %p163
      %p166 = scmp.ne.s32.totalorder %s149, %s165
      %p167 = scmp.eq.s32.totalorder %s26, 0
      %p168 = por %p166, %p167
      %s170 = sadd.s32 %s169, 1
      %p173 = scmp.eq.s32.totalorder %s20, 3
      %p174 = scmp.ne.s32.totalorder %s169, %s171
      %p175 = scmp.eq.s32.totalorder %s20, 0
      %p176 = por %p174, %p175
      %p177 = scmp.ne.s32.totalorder %s169, %s171
      %p178 = scmp.eq.s32.totalorder %s25, 3
      %p179 = por %p177, %p178
      %p180 = scmp.ne.s32.totalorder %s171, %s172
      %p181 = scmp.eq.s32.totalorder %s25, 0
      %p182 = por %p180, %p181
      %p183 = scmp.ne.s32.totalorder %s171, %s172
      %p184 = scmp.eq.s32.totalorder %s26, 3
      %p185 = por %p183, %p184
      %p187 = scmp.ne.s32.totalorder %s172, %s186
      %p188 = scmp.eq.s32.totalorder %s26, 0
      %p189 = por %p187, %p188
      %s190 = ssub.s32 %s20, %s27
      %p191 = scmp.eq.s32.totalorder %s190, 0
      %s193 = sadd.s32 %s192, 1
      %s194 = scalar_select %p191, %s192, %s193
      %p197 = pneg %p191
      %p198 = scmp.eq.s32.totalorder %s20, 3
      %p199 = por %p197, %p198
      %p200 = scmp.ne.s32.totalorder %s192, %s195
      %p201 = scmp.eq.s32.totalorder %s20, 0
      %p202 = por %p200, %p201
      %p203 = scmp.ne.s32.totalorder %s192, %s195
      %p204 = scmp.eq.s32.totalorder %s25, 3
      %p205 = por %p203, %p204
      %p206 = scmp.ne.s32.totalorder %s195, %s196
      %p207 = scmp.eq.s32.totalorder %s25, 0
      %p208 = por %p206, %p207
      %p209 = scmp.ne.s32.totalorder %s195, %s196
      %p210 = scmp.eq.s32.totalorder %s26, 3
      %p211 = por %p209, %p210
      %p213 = scmp.ne.s32.totalorder %s196, %s212
      %p214 = scmp.eq.s32.totalorder %s26, 0
      %p215 = por %p213, %p214
      %s217 = sadd.s32 %s216, 1
      %p220 = scmp.eq.s32.totalorder %s20, 3
      %p221 = scmp.ne.s32.totalorder %s216, %s218
      %p222 = scmp.eq.s32.totalorder %s20, 0
      %p223 = por %p221, %p222
      %p224 = scmp.ne.s32.totalorder %s216, %s218
      %p225 = scmp.eq.s32.totalorder %s25, 3
      %p226 = por %p224, %p225
      %p227 = scmp.ne.s32.totalorder %s218, %s219
      %p228 = scmp.eq.s32.totalorder %s25, 0
      %p229 = por %p227, %p228
      %p230 = scmp.ne.s32.totalorder %s218, %s219
      %p231 = scmp.eq.s32.totalorder %s26, 3
      %p232 = por %p230, %p231
      %p234 = scmp.ne.s32.totalorder %s219, %s233
      %p235 = scmp.eq.s32.totalorder %s26, 0
      %p236 = por %p234, %p235
      %p237 = scmp.le.s32.totalorder 1, %s20
      %p238 = scmp.lt.s32.totalorder %s20, 5
      %p239 = pnand %p237, %p238
      %p240 = pneg %p239
      // Predicated region
      $region9: #{memory_forward.1} parent=5 // pred_check
        _
      $region10: #{memory_forward.1} parent=5 // pred_check_branch
        %242 = sbr.rel (%p239) target = $region12
      $region11: #{memory_forward.1} parent=5 // pred_region
        %s243 = ssub.s32 %s20, 1
        // Predicated region
        $region13: #{memory_forward.1} parent=11 // pred_check
          %p244 = pneg %p67
        $region14: #{memory_forward.1} parent=11 // pred_check_branch
          %246 = sbr.rel (%p244) target = $region16
        $region15: #{memory_forward.1} parent=11 // pred_region
          _
        $region16: #{memory_forward.1} parent=11 // pred_fallthru
          _
        // Predicated region
        $region17: #{memory_forward.1} parent=11 // pred_check
          %p247 = pneg %p88
        $region18: #{memory_forward.1} parent=11 // pred_check_branch
          %249 = sbr.rel (%p247) target = $region20
        $region19: #{memory_forward.1} parent=11 // pred_region
          _
        $region20: #{memory_forward.1} parent=11 // pred_fallthru
          _
      $region12: #{memory_forward.1} parent=5 // pred_fallthru
        _
      %p250 = scmp.lt.s32.totalorder %s20, 4
      // Predicated region
      $region21: #{memory_forward.1} parent=5 // pred_check
        %p251 = pneg %p250
      $region22: #{memory_forward.1} parent=5 // pred_check_branch
        %253 = sbr.rel (%p251) target = $region24
      $region23: #{memory_forward.1} parent=5 // pred_region
        // Predicated region
        $region25: #{memory_forward.1} parent=23 // pred_check
          %p254 = pneg %p40
        $region26: #{memory_forward.1} parent=23 // pred_check_branch
          %256 = sbr.rel (%p254) target = $region28
        $region27: #{memory_forward.1} parent=23 // pred_region
          %s257 = sand.u32 %s30, 1
          %s258 = sand.u32 %s30, 1
          %s259 = smul.addr %s258, 32
          %s260 = scalar_lea.vmem [#allocation5], %s259
          %s261 = smul.addr %s20, 8
          %s262 = scalar_lea.vmem %s0, %s261
          // Predicated region
          $region29: #{memory_forward.1} parent=27 // pred_check
            _
          $region30: #{memory_forward.1} parent=27 // pred_check_branch
            %264 = sbr.rel (0) target = $region32
          $region31: #{memory_forward.1} parent=27 // pred_region
            // Predicated region
            $region33: #{memory_forward.1} parent=31 // pred_check
              _
            $region34: #{memory_forward.1} parent=31 // pred_check_branch
              %266 = sbr.rel (0) target = $region36
            $region35: #{memory_forward.1} parent=31 // pred_region
              // Predicated region
              $region48: #{memory_forward.1} parent=35 // pred_check
                _
              $region49: #{memory_forward.1} parent=35 // pred_check_branch
                %287 = sbr.rel (0) target = $region51
              $region50: #{memory_forward.1} parent=35 // pred_region
                loop: start=0, step=1, limit=1
                $region52: #{memory_forward.1} parent=50 // loop_pre_header
                  _
                $region53: #{memory_forward.1} parent=50 // loop_header
                  %s289 = sphi 0, %s293
                  %p290 = scmp.ge.s32.totalorder %s289, 1
                  %s294 = sphi %s262, %s262
                  %s295 = sphi %s260, %s260
                $region54: #{memory_forward.1} parent=50 // loop_header_branch
                  %292 = sbr.rel (%p290) target = $region58
                $region55: #{memory_forward.1} parent=50 // loop_body
                  %v296 = vld [vmem:[%s294] sm:$0xff]
                  %297 = vst [vmem:[%s295] sm:$0xff] %v296
                  %v298 = vld [vmem:[%s294 + $0x20] sm:$0xff]
                  %299 = vst [vmem:[%s295 + $0x8] sm:$0xff] %v298
                  %v300 = vld [vmem:[%s294 + $0x40] sm:$0xff]
                  %301 = vst [vmem:[%s295 + $0x10] sm:$0xff] %v300
                  %v302 = vld [vmem:[%s294 + $0x60] sm:$0xff]
                  %303 = vst [vmem:[%s295 + $0x18] sm:$0xff] %v302
                $region56: #{memory_forward.1} parent=50 // loop_footer
                  %s293 = sadd.s32 1, %s289
                $region57: #{memory_forward.1} parent=50 // loop_footer_branch
                  %288 = sbr.rel target = $region53
                $region58: #{memory_forward.1} parent=50 // loop_exit
                  _
              $region51: #{memory_forward.1} parent=35 // pred_fallthru
                _
              // Predicated region
              $region59: #{memory_forward.1} parent=35 // pred_check
                _
              $region60: #{memory_forward.1} parent=35 // pred_check_branch
                %305 = sbr.rel target = $region62
              $region61: #{memory_forward.1} parent=35 // pred_region
                _
              $region62: #{memory_forward.1} parent=35 // pred_fallthru
                _
            $region36: #{memory_forward.1} parent=31 // pred_fallthru
              _
            // Predicated region
            $region37: #{memory_forward.1} parent=31 // pred_check
              _
            $region38: #{memory_forward.1} parent=31 // pred_check_branch
              %268 = sbr.rel target = $region40
            $region39: #{memory_forward.1} parent=31 // pred_region
              loop: start=0, step=1, limit=1
              $region41: #{memory_forward.1} parent=39 // loop_pre_header
                _
              $region42: #{memory_forward.1} parent=39 // loop_header
                %s271 = sphi 0, %s275
                %p272 = scmp.ge.s32.totalorder %s271, 1
                %s276 = sphi %s262, %s262
                %s277 = sphi %s260, %s260
              $region43: #{memory_forward.1} parent=39 // loop_header_branch
                %274 = sbr.rel (%p272) target = $region47
              $region44: #{memory_forward.1} parent=39 // loop_body
                %v278 = vld [vmem:[%s276] sm:$0xff]
                %279 = vst [vmem:[%s277] sm:$0xff] %v278
                %v280 = vld [vmem:[%s276 + $0x20] sm:$0xff]
                %281 = vst [vmem:[%s277 + $0x8] sm:$0xff] %v280
                %v282 = vld [vmem:[%s276 + $0x40] sm:$0xff]
                %283 = vst [vmem:[%s277 + $0x10] sm:$0xff] %v282
                %v284 = vld [vmem:[%s276 + $0x60] sm:$0xff]
                %285 = vst [vmem:[%s277 + $0x18] sm:$0xff] %v284
              $region45: #{memory_forward.1} parent=39 // loop_footer
                %s275 = sadd.s32 1, %s271
              $region46: #{memory_forward.1} parent=39 // loop_footer_branch
                %270 = sbr.rel target = $region42
              $region47: #{memory_forward.1} parent=39 // loop_exit
                _
            $region40: #{memory_forward.1} parent=31 // pred_fallthru
              _
          $region32: #{memory_forward.1} parent=27 // pred_fallthru
            _
          %306 = vnop
        $region28: #{memory_forward.1} parent=23 // pred_fallthru
          _
      $region24: #{memory_forward.1} parent=5 // pred_fallthru
        _
      %p307 = scmp.le.s32.totalorder 1, %s20
      %p308 = scmp.lt.s32.totalorder %s20, 5
      %p309 = pnand %p307, %p308
      %p310 = pneg %p309
      // Predicated region
      $region63: #{memory_forward.1} parent=5 // pred_check
        _
      $region64: #{memory_forward.1} parent=5 // pred_check_branch
        %312 = sbr.rel (%p309) target = $region66
      $region65: #{memory_forward.1} parent=5 // pred_region
        %s313 = ssub.s32 %s20, 1
        %s314 = sand.u32 %s33, 1
        %s315 = sand.u32 %s33, 1
        %s316 = smul.addr %s315, 32
        %s317 = scalar_lea.vmem [#allocation5], %s316
        // Predicated region
        $region67: #{memory_forward.1} parent=65 // pred_check
          %p318 = pneg %p46
        $region68: #{memory_forward.1} parent=65 // pred_check_branch
          %320 = sbr.rel (%p318) target = $region70
        $region69: #{memory_forward.1} parent=65 // pred_region
          _
        $region70: #{memory_forward.1} parent=65 // pred_fallthru
          _
        %s321 = sand.u32 %s33, 1
        %s322 = sand.u32 %s33, 1
        %s323 = smul.addr %s322, 32
        %s324 = scalar_lea.vmem [#allocation5], %s323
        %p325 = pneg %p46
        %p326 = pneg %p43
        %p327 = pneg %p67
        %p328 = pneg %p64
        %p329 = pneg %p88
        %p330 = pneg %p85
        %p331 = pneg %p114
        %p332 = pneg %p111
        %s333 = sand.u32 %s101, 1
        %s334 = sand.u32 %s101, 1
        %s335 = smul.addr %s334, 64
        %s336 = scalar_lea.vmem [#allocation6], %s335
        %p337 = pneg %p135
        %p338 = pneg %p132
        %p339 = pneg %p161
        %p340 = pneg %p158
        %s341 = sand.u32 %s148, 1
        %s342 = sand.u32 %s148, 1
        %s343 = smul.addr %s342, 16
        %s344 = scalar_lea.vmem [#allocation10], %s343
        %p345 = pneg %p182
        %p346 = pneg %p179
        %p347 = pneg %p208
        %p348 = pneg %p205
        %s349 = sand.u32 %s195, 1
        %s350 = scalar_lea.sflag [#allocation12], %s349
        %s351 = sand.u32 %s195, 1
        %s352 = smul.addr %s351, 16
        %s353 = scalar_lea.vmem [#allocation11], %s352
        %p354 = pneg %p229
        %p355 = pneg %p226
        %p357 = scmp.eq.s32.totalorder %s25, 0
        // Predicated region
        $region71: #{memory_forward.1} parent=65 // pred_check
          %p358 = pneg %p357
        $region72: #{memory_forward.1} parent=65 // pred_check_branch
          %360 = sbr.rel (%p358) target = $region74
        $region73: #{memory_forward.1} parent=65 // pred_region
          %vm361 = vcmask 261120
          %362 = vst.msk [vmem:[#allocation7] sm:$0xff] %vm361, 0.0
          %vm363 = vcmask 254976
          %364 = vst.msk [vmem:[#allocation7 + $0x8] sm:$0x3] %vm363, 0.0
          %vm365 = vcmask 7168
          %366 = vst.msk [vmem:[%s6] sm:$0xff] %vm365, 0.0
          %vm367 = vcmask 1024
          %368 = vst.msk [vmem:[%s6 + $0x8] sm:$0x3] %vm367, 0.0
          %369 = vst.msk [vmem:[#allocation2] sm:$0xff] %vm365, 0.0
          %370 = vst.msk [vmem:[#allocation2 + $0x8] sm:$0x3] %vm367, 0.0
          %vm371 = vcmask 0
          %372 = vst.msk [vmem:[#allocation3] sm:$0x1] %vm371, 0.0
          %373 = vst.msk [vmem:[#allocation4] sm:$0x1] %vm371, 0.0
        $region74: #{memory_forward.1} parent=65 // pred_fallthru
          _
        %v374 = vld [vmem:[%s1] sm:$0xff]
        %v375 = vld [vmem:[%s1 + $0x8] sm:$0x3]
        %v376 = vld [vmem:[%s317] sm:$0xff]
        %v377 = vld [vmem:[%s317 + $0x8] sm:$0xff]
        %v378 = vld [vmem:[%s317 + $0x10] sm:$0xff]
        %v379 = vld [vmem:[%s317 + $0x18] sm:$0xff]
        %v380 = vmul.f32 %v376, %v376
        %v381 = vmul.f32 %v377, %v377
        %v382 = vmul.f32 %v378, %v378
        %v383 = vmul.f32 %v379, %v379
        %v384 = vadd.f32 %v380, %v381
        %v385 = vadd.f32 %v384, %v382
        %v386 = vadd.f32 %v385, %v383
        %v387 = vrot.slane %v386, 4
        %v388 = vadd.f32 %v386, %v387
        %v389 = vrot.slane %v388, 2
        %v390 = vadd.f32 %v388, %v389
        %v391 = vrot.slane %v390, 1
        %v392 = vadd.f32 %v390, %v391
        %v393 = vmax.f32 %v392, 1e-24
        %v394 = vrsqrt.pop %v393
        %v395 = vmul.f32 %v376, %v394
        %v396 = vmul.f32 %v377, %v394
        %v397 = vmul.f32 %v378, %v394
        %v398 = vmul.f32 %v379, %v394
        %v399 = vpack.c.bf16 %v396, %v395
        %v400 = vpack.c.bf16 %v398, %v397
        %v401 = vpack.c.bf16 %v375, %v374
        %vm402 = vcmask 261120
        %v404 = vsel %vm402, %v401, 0
        %406 = vmatprep.subr.bf16.mxu0 0
        %407 = vmatpush1.bf16.msra.mxu0 %v399
        %408 = vmatprep.subr.bf16.mxu0 0
        %409 = vmatpush1.bf16.msra.mxu0 %v400
        %410 = vmatprep.subr.bf16.mxu0 0
        %411 = vmatpush1.bf16.msra.mxu0 0
        %412 = vmatprep.subr.bf16.mxu0 0
        %413 = vmatpush1.bf16.msra.mxu0 0
        %414 = vmatprep.subr.bf16.mxu0 0
        %415 = vmatpush1.bf16.msra.mxu0 0
        %416 = vmatprep.subr.bf16.mxu0 0
        %417 = vmatpush1.bf16.msra.mxu0 0
        %418 = vmatprep.subr.bf16.mxu0 0
        %419 = vmatpush1.bf16.msra.mxu0 0
        %420 = vmatprep.subr.bf16.mxu0 0
        %421 = vmatpush1.bf16.msra.mxu0 0
        %422 = vmatprep.subr.bf16.mxu0 0
        %423 = vmatpush1.bf16.msra.mxu0 0
        %424 = vmatprep.subr.bf16.mxu0 0
        %425 = vmatpush1.bf16.msra.mxu0 0
        %426 = vmatprep.subr.bf16.mxu0 0
        %427 = vmatpush1.bf16.msra.mxu0 0
        %428 = vmatprep.subr.bf16.mxu0 0
        %429 = vmatpush1.bf16.msra.mxu0 0
        %430 = vmatprep.subr.bf16.mxu0 0
        %431 = vmatpush1.bf16.msra.mxu0 0
        %432 = vmatprep.subr.bf16.mxu0 0
        %433 = vmatpush1.bf16.msra.mxu0 0
        %434 = vmatprep.subr.bf16.mxu0 0
        %435 = vmatpush1.bf16.msra.mxu0 0
        %436 = vmatprep.subr.bf16.mxu0 0
        %437 = vmatpush1.bf16.msra.mxu0 0
        %438 = vmatprep.mubr.bf16.mxu0 0
        %439 = vmatmul.mubr.bf16.gmra.mrb[0].mxu0 %v404
        %v440 = vpop.f32.mrb[0].mxu0
        %v441 = vadd.f32 0.0, %v440
        %v442 = vpop.f32.mrb[0].mxu0
        %v443 = vpop.f32.mrb[0].mxu0
        %v444 = vadd.f32 0.0, %v443
        %v445 = vpop.f32.mrb[0].mxu0
        %446 = vdwg.mxu0
        %v447 = vmul.f32 %v374, %v374
        %v448 = vmul.f32 %v375, %v375
        %v449 = vsel %vm402, %v447, 0.0
        %450 = vadd.xlane.f32.xlu0 %v449
        %v451 = vpop.xlane.xlu0 %450
        %vm452 = vcmask 254976
        %v453 = vsel %vm452, %v448, 0.0
        %454 = vadd.xlane.f32.xlu0 %v453
        %v455 = vpop.xlane.xlu0 %454
        %v456 = vrsqrt.pop %v451
        %v457 = vmul.f32 %v451, %v456
        %vm458 = vcmp.eq.f32.partialorder %v451, inf
        %v459 = vsel %vm458, %v451, %v457
        %vm460 = vcmp.eq.f32.partialorder %v451, 0.0
        %v461 = vand.u32 %v451, 2147483648
        %v462 = vsel %vm460, %v461, %v459
        %v463 = vrsqrt.pop %v455
        %v464 = vmul.f32 %v455, %v463
        %vm465 = vcmp.eq.f32.partialorder %v455, inf
        %v466 = vsel %vm465, %v455, %v464
        %vm467 = vcmp.eq.f32.partialorder %v455, 0.0
        %v468 = vand.u32 %v455, 2147483648
        %v469 = vsel %vm467, %v468, %v466
        %v470 = vsub.f32 %v441, %v462
        %v471 = vsub.f32 %v444, %v469
        %v472 = vmul.f32 %v470, 1.442695
        %v473 = vpow.pop %v472
        %v474 = vmul.f32 %v471, 1.442695
        %v475 = vpow.pop %v474
        %476 = vst [vmem:[%s344] sm:$0xff] %v473
        %477 = vst [vmem:[%s344 + $0x8] sm:$0x3] %v475
        %vm478 = vcmask 1041408
        %v479 = vsel %vm478, %v444, -inf
        %v480 = vmax.f32 %v441, %v479
        %v481 = vrot.slane %v480, 4
        %v482 = vmax.f32 %v480, %v481
        %v483 = vrot.slane %v482, 2
        %v484 = vmax.f32 %v482, %v483
        %v485 = vrot.slane %v484, 1
        %v486 = vmax.f32 %v484, %v485
        %v487 = vsub.f32 %v441, %v486
        %v488 = vsub.f32 %v444, %v486
        %v489 = vmul.f32 %v487, 1.442695
        %v490 = vpow.pop %v489
        %v491 = vmul.f32 %v488, 1.442695
        %v492 = vpow.pop %v491
        %v493 = vsel %vm478, %v492, 0.0
        %v494 = vadd.f32 %v490, %v493
        %v495 = vrot.slane %v494, 4
        %v496 = vadd.f32 %v494, %v495
        %v497 = vrot.slane %v496, 2
        %v498 = vadd.f32 %v496, %v497
        %v499 = vrot.slane %v498, 1
        %v500 = vadd.f32 %v498, %v499
        %v501 = vrcp.pop %v500
        %v502 = vmul.f32 %v490, %v501
        %v503 = vmul.f32 %v492, %v501
        %504 = vst [vmem:[%s353] sm:$0xff] %v502
        %505 = vst [vmem:[%s353 + $0x8] sm:$0x3] %v503
        %v506 = vlaneseq
        %v507 = vshrl.u32 %v506, 7
        %v508 = vadd.s32 %v507, 8
        %vm509 = vcmp.ge.f32.partialorder %v441, %v486
        %vm510 = vcmp.ge.f32.partialorder %v444, %v486
        %v511 = vsel %vm509, %v507, 10
        %v512 = vsel %vm510, %v508, 10
        %v513 = vsel %vm478, %v512, 2147483647
        %vm514 = vcmp.lt.s32.totalorder %v511, %v513
        %v515 = vsel %vm514, %v511, %v513
        %v516 = vrot.slane %v515, 4
        %vm517 = vcmp.lt.s32.totalorder %v515, %v516
        %v518 = vsel %vm517, %v515, %v516
        %v519 = vrot.slane %v518, 2
        %vm520 = vcmp.lt.s32.totalorder %v518, %v519
        %v521 = vsel %vm520, %v518, %v519
        %v522 = vrot.slane %v521, 1
        %vm523 = vcmp.lt.s32.totalorder %v521, %v522
        %v524 = vsel %vm523, %v521, %v522
        %vm525 = vcmp.eq.s32.totalorder %v507, %v524
        %vm526 = vcmp.eq.s32.totalorder %v508, %v524
        %v527 = vsel %vm525, 1, 0
        %v528 = vsel %vm526, 1, 0
        %v529 = vcvt.s32.f32 %v527
        %v530 = vcvt.s32.f32 %v528
        %v531 = vsel %vm525, -inf, %v441
        %v532 = vsel %vm526, -inf, %v444
        %v533 = vsel %vm478, %v532, -inf
        %v534 = vmax.f32 %v531, %v533
        %v535 = vrot.slane %v534, 4
        %v536 = vmax.f32 %v534, %v535
        %v537 = vrot.slane %v536, 2
        %v538 = vmax.f32 %v536, %v537
        %v539 = vrot.slane %v538, 1
        %v540 = vmax.f32 %v538, %v539
        %vm541 = vcmp.ge.f32.partialorder %v531, %v540
        %vm542 = vcmp.ge.f32.partialorder %v532, %v540
        %v543 = vsel %vm541, %v507, 10
        %v544 = vsel %vm542, %v508, 10
        %v545 = vsel %vm478, %v544, 2147483647
        %vm546 = vcmp.lt.s32.totalorder %v543, %v545
        %v547 = vsel %vm546, %v543, %v545
        %v548 = vrot.slane %v547, 4
        %vm549 = vcmp.lt.s32.totalorder %v547, %v548
        %v550 = vsel %vm549, %v547, %v548
        %v551 = vrot.slane %v550, 2
        %vm552 = vcmp.lt.s32.totalorder %v550, %v551
        %v553 = vsel %vm552, %v550, %v551
        %v554 = vrot.slane %v553, 1
        %vm555 = vcmp.lt.s32.totalorder %v553, %v554
        %v556 = vsel %vm555, %v553, %v554
        %vm557 = vcmp.eq.s32.totalorder %v507, %v556
        %vm558 = vcmp.eq.s32.totalorder %v508, %v556
        %v559 = vsel %vm557, 1, 0
        %v560 = vsel %vm558, 1, 0
        %v561 = vcvt.s32.f32 %v559
        %v562 = vcvt.s32.f32 %v560
        %v563 = vpack.c.bf16 %v530, %v529
        %v564 = vpack.c.bf16 %v562, %v561
        %v565 = vpack.c.bf16 %v503, %v502
        %v566 = vld [vmem:[%s2] sm:$0xff]
        %v567 = vld [vmem:[%s2 + $0x8] sm:$0xff]
        %v568 = vld [vmem:[%s2 + $0x10] sm:$0xff]
        %v569 = vld [vmem:[%s2 + $0x18] sm:$0xff]
        %v570 = vpack.c.bf16 %v567, %v566
        %v571 = vpack.c.bf16 %v569, %v568
        %vm572 = vcmask 80896
        %v574 = vsel %vm572, %v570, 0
        %v577 = vsel %vm572, %v571, 0
        %vm579 = vcmask 1044480
        %v581 = vsel %vm579, %v563, 0
        %v584 = vsel %vm579, %v564, 0
        %v587 = vsel %vm579, %v565, 0
        %589 = vmatprep.subr.bf16.mxu0 %v584
        %590 = vmatpush1.bf16.msra.mxu0 %v581
        %591 = vmatprep.subr.bf16.mxu0 0
        %592 = vmatpush1.bf16.msra.mxu0 0
        %593 = vmatprep.subr.bf16.mxu0 0
        %594 = vmatpush1.bf16.msra.mxu0 0
        %595 = vmatprep.subr.bf16.mxu0 0
        %596 = vmatpush1.bf16.msra.mxu0 0
        %597 = vmatprep.subr.bf16.mxu0 0
        %598 = vmatpush1.bf16.msra.mxu0 0
        %599 = vmatprep.subr.bf16.mxu0 0
        %600 = vmatpush1.bf16.msra.mxu0 0
        %601 = vmatprep.subr.bf16.mxu0 0
        %602 = vmatpush1.bf16.msra.mxu0 0
        %603 = vmatprep.subr.bf16.mxu0 0
        %604 = vmatpush1.bf16.msra.mxu0 0
        %605 = vmatprep.subr.bf16.mxu0 0
        %606 = vmatpush1.bf16.msra.mxu0 0
        %607 = vmatprep.subr.bf16.mxu0 0
        %608 = vmatpush1.bf16.msra.mxu0 0
        %609 = vmatprep.subr.bf16.mxu0 0
        %610 = vmatpush1.bf16.msra.mxu0 0
        %611 = vmatprep.subr.bf16.mxu0 0
        %612 = vmatpush1.bf16.msra.mxu0 0
        %613 = vmatprep.subr.bf16.mxu0 0
        %614 = vmatpush1.bf16.msra.mxu0 0
        %615 = vmatprep.subr.bf16.mxu0 0
        %616 = vmatpush1.bf16.msra.mxu0 0
        %617 = vmatprep.subr.bf16.mxu0 0
        %618 = vmatpush1.bf16.msra.mxu0 0
        %619 = vmatprep.subr.bf16.mxu0 0
        %620 = vmatpush1.bf16.msra.mxu0 0
        %621 = vmatprep.mubr.bf16.mxu0 0
        %622 = vmatmul.mubr.bf16.gmra.mrb[0].mxu0 %v574
        %v623 = vpop.f32.mrb[0].mxu0
        %v624 = vadd.f32 0.0, %v623
        %v625 = vpop.f32.mrb[0].mxu0
        %v626 = vadd.f32 0.0, %v625
        %v627 = vpop.f32.mrb[0].mxu0
        %v628 = vadd.f32 0.0, %v627
        %v629 = vpop.f32.mrb[0].mxu0
        %v630 = vadd.f32 0.0, %v629
        %631 = vmatprep.mubr.bf16.mxu0 0
        %632 = vmatmul.mubr.bf16.gmra.mrb[0].mxu0 %v577
        %v633 = vpop.f32.mrb[0].mxu0
        %v634 = vadd.f32 0.0, %v633
        %v635 = vpop.f32.mrb[0].mxu0
        %v636 = vadd.f32 0.0, %v635
        %v637 = vpop.f32.mrb[0].mxu0
        %v638 = vadd.f32 0.0, %v637
        %v639 = vpop.f32.mrb[0].mxu0
        %v640 = vadd.f32 0.0, %v639
        %641 = vdwg.mxu0
        %642 = vmatprep.subr.bf16.mxu0 0
        %643 = vmatpush1.bf16.msra.mxu0 %v587
        %644 = vmatprep.subr.bf16.mxu0 0
        %645 = vmatpush1.bf16.msra.mxu0 0
        %646 = vmatprep.subr.bf16.mxu0 0
        %647 = vmatpush1.bf16.msra.mxu0 0
        %648 = vmatprep.subr.bf16.mxu0 0
        %649 = vmatpush1.bf16.msra.mxu0 0
        %650 = vmatprep.subr.bf16.mxu0 0
        %651 = vmatpush1.bf16.msra.mxu0 0
        %652 = vmatprep.subr.bf16.mxu0 0
        %653 = vmatpush1.bf16.msra.mxu0 0
        %654 = vmatprep.subr.bf16.mxu0 0
        %655 = vmatpush1.bf16.msra.mxu0 0
        %656 = vmatprep.subr.bf16.mxu0 0
        %657 = vmatpush1.bf16.msra.mxu0 0
        %658 = vmatprep.subr.bf16.mxu0 0
        %659 = vmatpush1.bf16.msra.mxu0 0
        %660 = vmatprep.subr.bf16.mxu0 0
        %661 = vmatpush1.bf16.msra.mxu0 0
        %662 = vmatprep.subr.bf16.mxu0 0
        %663 = vmatpush1.bf16.msra.mxu0 0
        %664 = vmatprep.subr.bf16.mxu0 0
        %665 = vmatpush1.bf16.msra.mxu0 0
        %666 = vmatprep.subr.bf16.mxu0 0
        %667 = vmatpush1.bf16.msra.mxu0 0
        %668 = vmatprep.subr.bf16.mxu0 0
        %669 = vmatpush1.bf16.msra.mxu0 0
        %670 = vmatprep.subr.bf16.mxu0 0
        %671 = vmatpush1.bf16.msra.mxu0 0
        %672 = vmatprep.subr.bf16.mxu0 0
        %673 = vmatpush1.bf16.msra.mxu0 0
        %674 = vmatprep.mubr.bf16.mxu0 0
        %675 = vmatmul.mubr.bf16.gmra.mrb[0].mxu0 %v574
        %v676 = vpop.f32.mrb[0].mxu0
        %v677 = vadd.f32 0.0, %v676
        %v678 = vpop.f32.mrb[0].mxu0
        %v679 = vpop.f32.mrb[0].mxu0
        %v680 = vadd.f32 0.0, %v679
        %v681 = vpop.f32.mrb[0].mxu0
        %682 = vmatprep.mubr.bf16.mxu0 0
        %683 = vmatmul.mubr.bf16.gmra.mrb[0].mxu0 %v577
        %v684 = vpop.f32.mrb[0].mxu0
        %v685 = vadd.f32 0.0, %v684
        %v686 = vpop.f32.mrb[0].mxu0
        %v687 = vpop.f32.mrb[0].mxu0
        %v688 = vadd.f32 0.0, %v687
        %v689 = vpop.f32.mrb[0].mxu0
        %690 = vdwg.mxu0
        %691 = vst [vmem:[%s336] sm:$0xff] %v395
        %692 = vst [vmem:[%s336 + $0x8] sm:$0xff] %v396
        %693 = vst [vmem:[%s336 + $0x10] sm:$0xff] %v397
        %694 = vst [vmem:[%s336 + $0x18] sm:$0xff] %v398
        %695 = vst [vmem:[%s336 + $0x20] sm:$0xff] %v677
        %696 = vst [vmem:[%s336 + $0x28] sm:$0xff] %v680
        %697 = vst [vmem:[%s336 + $0x30] sm:$0xff] %v685
        %698 = vst [vmem:[%s336 + $0x38] sm:$0xff] %v688
        %v699 = vsub.f32 %v395, %v624
        %v700 = vsub.f32 %v396, %v628
        %v701 = vsub.f32 %v397, %v634
        %v702 = vsub.f32 %v398, %v638
        %v703 = vld [vmem:[#allocation4] sm:$0x1]
        %v704 = vmul.f32 %v699, %v699
        %v705 = vmul.f32 %v700, %v700
        %v706 = vmul.f32 %v701, %v701
        %v707 = vmul.f32 %v702, %v702
        %v708 = vadd.f32 %v704, %v705
        %v709 = vadd.f32 %v708, %v706
        %v710 = vadd.f32 %v709, %v707
        %v711 = vrot.slane %v710, 4
        %v712 = vadd.f32 %v710, %v711
        %v713 = vrot.slane %v712, 2
        %v714 = vadd.f32 %v712, %v713
        %v715 = vrot.slane %v714, 1
        %v716 = vadd.f32 %v714, %v715
        %717 = vadd.xlane.f32.xlu0 %v716
        %v718 = vpop.xlane.xlu0 %717
        %v719 = vadd.f32 %v703, %v718
        %vm720 = vcmask 0
        %721 = vst.msk [vmem:[#allocation4] sm:$0x1] %vm720, %v719
        %v722 = vadd.f32 %v699, 1e-06
        %v723 = vadd.f32 %v700, 1e-06
        %v724 = vadd.f32 %v701, 1e-06
        %v725 = vadd.f32 %v702, 1e-06
        %v726 = vmul.f32 %v722, %v722
        %v727 = vmul.f32 %v723, %v723
        %v728 = vmul.f32 %v724, %v724
        %v729 = vmul.f32 %v725, %v725
        %v730 = vadd.f32 %v726, %v727
        %v731 = vadd.f32 %v730, %v728
        %v732 = vadd.f32 %v731, %v729
        %v733 = vrot.slane %v732, 4
        %v734 = vadd.f32 %v732, %v733
        %v735 = vrot.slane %v734, 2
        %v736 = vadd.f32 %v734, %v735
        %v737 = vrot.slane %v736, 1
        %v738 = vadd.f32 %v736, %v737
        %v739 = vrsqrt.pop %v738
        %v740 = vmul.f32 %v738, %v739
        %vm741 = vcmp.eq.f32.partialorder %v738, inf
        %v742 = vsel %vm741, %v738, %v740
        %vm743 = vcmp.eq.f32.partialorder %v738, 0.0
        %v744 = vand.u32 %v738, 2147483648
        %v745 = vsel %vm743, %v744, %v742
        %v746 = vsub.f32 %v395, %v626
        %v747 = vsub.f32 %v396, %v630
        %v748 = vsub.f32 %v397, %v636
        %v749 = vsub.f32 %v398, %v640
        %v750 = vadd.f32 %v746, 1e-06
        %v751 = vadd.f32 %v747, 1e-06
        %v752 = vadd.f32 %v748, 1e-06
        %v753 = vadd.f32 %v749, 1e-06
        %v754 = vmul.f32 %v750, %v750
        %v755 = vmul.f32 %v751, %v751
        %v756 = vmul.f32 %v752, %v752
        %v757 = vmul.f32 %v753, %v753
        %v758 = vadd.f32 %v754, %v755
        %v759 = vadd.f32 %v758, %v756
        %v760 = vadd.f32 %v759, %v757
        %v761 = vrot.slane %v760, 4
        %v762 = vadd.f32 %v760, %v761
        %v763 = vrot.slane %v762, 2
        %v764 = vadd.f32 %v762, %v763
        %v765 = vrot.slane %v764, 1
        %v766 = vadd.f32 %v764, %v765
        %v767 = vrsqrt.pop %v766
        %v768 = vmul.f32 %v766, %v767
        %vm769 = vcmp.eq.f32.partialorder %v766, inf
        %v770 = vsel %vm769, %v766, %v768
        %vm771 = vcmp.eq.f32.partialorder %v766, 0.0
        %v772 = vand.u32 %v766, 2147483648
        %v773 = vsel %vm771, %v772, %v770
        %v774 = vsub.f32 %v745, %v773
        %v775 = vadd.f32 %v774, 1.0
        %v776 = vmax.f32 %v775, 0.0
        %v777 = vld [vmem:[#allocation3] sm:$0x1]
        %778 = vadd.xlane.f32.xlu0 %v776
        %v779 = vpop.xlane.xlu0 %778
        %v780 = vadd.f32 %v777, %v779
        %781 = vst.msk [vmem:[#allocation3] sm:$0x1] %vm720, %v780
        %v782 = vmul.f32 %v529, %v473
        %v783 = vmul.f32 %v530, %v475
        %v784 = vpack.c.bf16 %v783, %v782
        %v785 = vld [vmem:[#allocation7] sm:$0xff]
        %v786 = vld [vmem:[#allocation7 + $0x8] sm:$0x3]
        %787 = vmatprep.subr.bf16.mxu0 0
        %788 = vmatpush1.bf16.xpose.msra.mxu0 %v399
        %789 = vmatprep.subr.bf16.mxu0 0
        %790 = vmatpush1.bf16.xpose.msra.mxu0 %v400
        %791 = vmatprep.subr.bf16.mxu0 0
        %792 = vmatpush1.bf16.xpose.msra.mxu0 0
        %793 = vmatprep.subr.bf16.mxu0 0
        %794 = vmatpush1.bf16.xpose.msra.mxu0 0
        %795 = vmatprep.subr.bf16.mxu0 0
        %796 = vmatpush1.bf16.xpose.msra.mxu0 0
        %797 = vmatprep.subr.bf16.mxu0 0
        %798 = vmatpush1.bf16.xpose.msra.mxu0 0
        %799 = vmatprep.subr.bf16.mxu0 0
        %800 = vmatpush1.bf16.xpose.msra.mxu0 0
        %801 = vmatprep.subr.bf16.mxu0 0
        %802 = vmatpush1.bf16.xpose.msra.mxu0 0
        %803 = vmatprep.subr.bf16.mxu0 0
        %804 = vmatpush1.bf16.xpose.msra.mxu0 0
        %805 = vmatprep.subr.bf16.mxu0 0
        %806 = vmatpush1.bf16.xpose.msra.mxu0 0
        %807 = vmatprep.subr.bf16.mxu0 0
        %808 = vmatpush1.bf16.xpose.msra.mxu0 0
        %809 = vmatprep.subr.bf16.mxu0 0
        %810 = vmatpush1.bf16.xpose.msra.mxu0 0
        %811 = vmatprep.subr.bf16.mxu0 0
        %812 = vmatpush1.bf16.xpose.msra.mxu0 0
        %813 = vmatprep.subr.bf16.mxu0 0
        %814 = vmatpush1.bf16.xpose.msra.mxu0 0
        %815 = vmatprep.subr.bf16.mxu0 0
        %816 = vmatpush1.bf16.xpose.msra.mxu0 0
        %817 = vmatprep.subr.bf16.mxu0 0
        %818 = vmatpush1.bf16.xpose.msra.mxu0 0
        %819 = vmatprep.mubr.bf16.mxu0 0
        %820 = vmatmul.mubr.bf16.gmra.mrb[0].mxu0 %v784
        %v821 = vpop.f32.mrb[0].mxu0
        %v822 = vadd.f32 0.0, %v821
        %v823 = vpop.f32.mrb[0].mxu0
        %v824 = vpop.f32.mrb[0].mxu0
        %v825 = vadd.f32 0.0, %v824
        %v826 = vpop.f32.mrb[0].mxu0
        %827 = vdwg.mxu0
        %v828 = vadd.f32 %v785, %v822
        %v829 = vadd.f32 %v786, %v825
        %830 = vst.msk [vmem:[#allocation7] sm:$0xff] %vm402, %v828
        %831 = vst.msk [vmem:[#allocation7 + $0x8] sm:$0x3] %vm452, %v829
        %v832 = vld [vmem:[%s6] sm:$0xff]
        %v833 = vld [vmem:[%s6 + $0x8] sm:$0x3]
        %834 = vadd.xlane.f32.xlu0 %v473
        %v835 = vpop.xlane.xlu0 %834
        %v836 = vsel %vm478, %v475, 0.0
        %837 = vadd.xlane.f32.xlu0 %v836
        %v838 = vpop.xlane.xlu0 %837
        %v839 = vadd.f32 %v832, %v835
        %v840 = vadd.f32 %v833, %v838
        %vm841 = vcmask 7168
        %842 = vst.msk [vmem:[%s6] sm:$0xff] %vm841, %v839
        %vm843 = vcmask 1024
        %844 = vst.msk [vmem:[%s6 + $0x8] sm:$0x3] %vm843, %v840
        %v845 = vld [vmem:[#allocation2] sm:$0xff]
        %v846 = vld [vmem:[#allocation2 + $0x8] sm:$0x3]
        %847 = vmax.xlane.f32.xlu0 %v473
        %v848 = vpop.xlane.xlu0 %847
        %v849 = vsel %vm478, %v475, -inf
        %850 = vmax.xlane.f32.xlu0 %v849
        %v851 = vpop.xlane.xlu0 %850
        %v852 = vmax.f32 %v845, %v848
        %v853 = vmax.f32 %v846, %v851
        %854 = vst.msk [vmem:[#allocation2] sm:$0xff] %vm841, %v852
        %855 = vst.msk [vmem:[#allocation2 + $0x8] sm:$0x3] %vm843, %v853
        %p856 = scmp.eq.s32.totalorder %s25, 3
        // Predicated region
        $region75: #{memory_forward.1} parent=65 // pred_check
          %p857 = pneg %p856
        $region76: #{memory_forward.1} parent=65 // pred_check_branch
          %859 = sbr.rel (%p857) target = $region78
        $region77: #{memory_forward.1} parent=65 // pred_region
          %v860 = vld [vmem:[#allocation7] sm:$0xff]
          %v861 = vld [vmem:[#allocation7 + $0x8] sm:$0x3]
          %v862 = vld [vmem:[#allocation2] sm:$0xff]
          %v863 = vld [vmem:[#allocation2 + $0x8] sm:$0x3]
          %v864 = vrcp.pop %v862
          %v865 = vrcp.pop %v863
          %867 = vset.pattern.permute.xlu0 0
          %868 = vperm.xlu0 %867, %v864
          %v869 = vpop.permute.xlu0 %868
          %872 = vset.pattern.permute.xlu0 0
          %873 = vperm.xlu0 %872, %v865
          %v874 = vpop.permute.xlu0 %873
          %v876 = vmul.f32 %v860, %v869
          %v877 = vmul.f32 %v861, %v874
          %v878 = vadd.f32 %v876, %v374
          %v879 = vadd.f32 %v877, %v375
          %v880 = vmul.f32 %v878, %v878
          %v881 = vmul.f32 %v879, %v879
          %v882 = vsel %vm402, %v880, 0.0
          %883 = vadd.xlane.f32.xlu0 %v882
          %v884 = vpop.xlane.xlu0 %883
          %v885 = vsel %vm452, %v881, 0.0
          %886 = vadd.xlane.f32.xlu0 %v885
          %v887 = vpop.xlane.xlu0 %886
          %v888 = vmax.f32 %v884, 1e-24
          %v889 = vmax.f32 %v887, 1e-24
          %v890 = vrsqrt.pop %v888
          %v891 = vrsqrt.pop %v889
          %v892 = vmul.f32 %v878, %v890
          %v893 = vmul.f32 %v879, %v891
          %894 = vst.msk [vmem:[#allocation7] sm:$0xff] %vm402, %v892
          %895 = vst.msk [vmem:[#allocation7 + $0x8] sm:$0x3] %vm452, %v893
          %v896 = vld [vmem:[#allocation3] sm:$0x1]
          %s897 = vtos %v896
          %s898 = smul.f32 %s897, 0.001953125
          %s899 = scalar_lea.smem [#allocation13], 0
          %900 = sst [smem:[%s899]] %s898
          %v901 = vld [vmem:[#allocation4] sm:$0x1]
          %s902 = vtos %v901
          %s903 = smul.f32 %s902, 6.1035156e-05
          %s904 = scalar_lea.smem [#allocation13], 1
          %905 = sst [smem:[%s904]] %s903
        $region78: #{memory_forward.1} parent=65 // pred_fallthru
          _
        %s906 = sand.u32 %s101, 1
        %s907 = sand.u32 %s101, 1
        %s908 = smul.addr %s907, 64
        %s909 = scalar_lea.vmem [#allocation6], %s908
        %s910 = sand.u32 %s148, 1
        %s911 = sand.u32 %s148, 1
        %s912 = smul.addr %s911, 16
        %s913 = scalar_lea.vmem [#allocation10], %s912
        %s914 = sand.u32 %s195, 1
        %s915 = scalar_lea.sflag [#allocation12], %s914
        %s916 = sand.u32 %s195, 1
        %s917 = smul.addr %s916, 16
        %s918 = scalar_lea.vmem [#allocation11], %s917
        // Predicated region
        $region79: #{memory_forward.1} parent=65 // pred_check
          %p919 = pneg %p111
        $region80: #{memory_forward.1} parent=65 // pred_check_branch
          %921 = sbr.rel (%p919) target = $region82
        $region81: #{memory_forward.1} parent=65 // pred_region
          %s922 = smul.addr %s25, 8
          %s923 = scalar_lea.vmem %s3, %s922
          // Predicated region
          $region83: #{memory_forward.1} parent=81 // pred_check
            _
          $region84: #{memory_forward.1} parent=81 // pred_check_branch
            %925 = sbr.rel (0) target = $region86
          $region85: #{memory_forward.1} parent=81 // pred_region
            // Predicated region
            $region87: #{memory_forward.1} parent=85 // pred_check
              _
            $region88: #{memory_forward.1} parent=85 // pred_check_branch
              %927 = sbr.rel (0) target = $region90
            $region89: #{memory_forward.1} parent=85 // pred_region
              // Predicated region
              $region102: #{memory_forward.1} parent=89 // pred_check
                _
              $region103: #{memory_forward.1} parent=89 // pred_check_branch
                %956 = sbr.rel (0) target = $region105
              $region104: #{memory_forward.1} parent=89 // pred_region
                loop: start=0, step=1, limit=1
                $region106: #{memory_forward.1} parent=104 // loop_pre_header
                  _
                $region107: #{memory_forward.1} parent=104 // loop_header
                  %s958 = sphi 0, %s962
                  %p959 = scmp.ge.s32.totalorder %s958, 1
                  %s963 = sphi %s909, %s909
                  %s964 = sphi %s923, %s923
                $region108: #{memory_forward.1} parent=104 // loop_header_branch
                  %961 = sbr.rel (%p959) target = $region112
                $region109: #{memory_forward.1} parent=104 // loop_body
                  %v965 = vld [vmem:[%s963] sm:$0xff]
                  %966 = vst [vmem:[%s964] sm:$0xff] %v965
                  %v967 = vld [vmem:[%s963 + $0x8] sm:$0xff]
                  %968 = vst [vmem:[%s964 + $0x20] sm:$0xff] %v967
                  %v969 = vld [vmem:[%s963 + $0x10] sm:$0xff]
                  %970 = vst [vmem:[%s964 + $0x40] sm:$0xff] %v969
                  %v971 = vld [vmem:[%s963 + $0x18] sm:$0xff]
                  %972 = vst [vmem:[%s964 + $0x60] sm:$0xff] %v971
                  %v973 = vld [vmem:[%s963 + $0x20] sm:$0xff]
                  %974 = vst [vmem:[%s964 + $0x80] sm:$0xff] %v973
                  %v975 = vld [vmem:[%s963 + $0x28] sm:$0xff]
                  %976 = vst [vmem:[%s964 + $0xa0] sm:$0xff] %v975
                  %v977 = vld [vmem:[%s963 + $0x30] sm:$0xff]
                  %978 = vst [vmem:[%s964 + $0xc0] sm:$0xff] %v977
                  %v979 = vld [vmem:[%s963 + $0x38] sm:$0xff]
                  %980 = vst [vmem:[%s964 + $0xe0] sm:$0xff] %v979
                $region110: #{memory_forward.1} parent=104 // loop_footer
                  %s962 = sadd.s32 1, %s958
                $region111: #{memory_forward.1} parent=104 // loop_footer_branch
                  %957 = sbr.rel target = $region107
                $region112: #{memory_forward.1} parent=104 // loop_exit
                  _
              $region105: #{memory_forward.1} parent=89 // pred_fallthru
                _
              // Predicated region
              $region113: #{memory_forward.1} parent=89 // pred_check
                _
              $region114: #{memory_forward.1} parent=89 // pred_check_branch
                %982 = sbr.rel target = $region116
              $region115: #{memory_forward.1} parent=89 // pred_region
                _
              $region116: #{memory_forward.1} parent=89 // pred_fallthru
                _
            $region90: #{memory_forward.1} parent=85 // pred_fallthru
              _
            // Predicated region
            $region91: #{memory_forward.1} parent=85 // pred_check
              _
            $region92: #{memory_forward.1} parent=85 // pred_check_branch
              %929 = sbr.rel target = $region94
            $region93: #{memory_forward.1} parent=85 // pred_region
              loop: start=0, step=1, limit=1
              $region95: #{memory_forward.1} parent=93 // loop_pre_header
                _
              $region96: #{memory_forward.1} parent=93 // loop_header
                %s932 = sphi 0, %s936
                %p933 = scmp.ge.s32.totalorder %s932, 1
                %s937 = sphi %s909, %s909
                %s938 = sphi %s923, %s923
              $region97: #{memory_forward.1} parent=93 // loop_header_branch
                %935 = sbr.rel (%p933) target = $region101
              $region98: #{memory_forward.1} parent=93 // loop_body
                %v939 = vld [vmem:[%s937] sm:$0xff]
                %940 = vst [vmem:[%s938] sm:$0xff] %v939
                %v941 = vld [vmem:[%s937 + $0x8] sm:$0xff]
                %942 = vst [vmem:[%s938 + $0x20] sm:$0xff] %v941
                %v943 = vld [vmem:[%s937 + $0x10] sm:$0xff]
                %944 = vst [vmem:[%s938 + $0x40] sm:$0xff] %v943
                %v945 = vld [vmem:[%s937 + $0x18] sm:$0xff]
                %946 = vst [vmem:[%s938 + $0x60] sm:$0xff] %v945
                %v947 = vld [vmem:[%s937 + $0x20] sm:$0xff]
                %948 = vst [vmem:[%s938 + $0x80] sm:$0xff] %v947
                %v949 = vld [vmem:[%s937 + $0x28] sm:$0xff]
                %950 = vst [vmem:[%s938 + $0xa0] sm:$0xff] %v949
                %v951 = vld [vmem:[%s937 + $0x30] sm:$0xff]
                %952 = vst [vmem:[%s938 + $0xc0] sm:$0xff] %v951
                %v953 = vld [vmem:[%s937 + $0x38] sm:$0xff]
                %954 = vst [vmem:[%s938 + $0xe0] sm:$0xff] %v953
              $region99: #{memory_forward.1} parent=93 // loop_footer
                %s936 = sadd.s32 1, %s932
              $region100: #{memory_forward.1} parent=93 // loop_footer_branch
                %931 = sbr.rel target = $region96
              $region101: #{memory_forward.1} parent=93 // loop_exit
                _
            $region94: #{memory_forward.1} parent=85 // pred_fallthru
              _
          $region86: #{memory_forward.1} parent=81 // pred_fallthru
            _
          %983 = vnop
        $region82: #{memory_forward.1} parent=65 // pred_fallthru
          _
        // Predicated region
        $region117: #{memory_forward.1} parent=65 // pred_check
          %p984 = pneg %p132
        $region118: #{memory_forward.1} parent=65 // pred_check_branch
          %986 = sbr.rel (%p984) target = $region120
        $region119: #{memory_forward.1} parent=65 // pred_region
          %s988 = ssub.s32 256, 256
          %989 = vsyncadd [#allocation8], %s988
          %s990 = sshll.u32 [#allocation7], 4
          %s991 = int_to_ptr.vmem [resolvable:$true] %s990
          %996 = dma.vmem_to_hbm [thread:$0]  %s991, 256, %s4, [#allocation8], 128, 128, 8
        $region120: #{memory_forward.1} parent=65 // pred_fallthru
          _
        // Predicated region
        $region121: #{memory_forward.1} parent=65 // pred_check
          %p997 = pneg %p158
        $region122: #{memory_forward.1} parent=65 // pred_check_branch
          %999 = sbr.rel (%p997) target = $region124
        $region123: #{memory_forward.1} parent=65 // pred_region
          %s1000 = smul.addr %s25, 8
          %s1001 = scalar_lea.vmem %s5, %s1000
          // Predicated region
          $region125: #{memory_forward.1} parent=123 // pred_check
            _
          $region126: #{memory_forward.1} parent=123 // pred_check_branch
            %1003 = sbr.rel (0) target = $region128
          $region127: #{memory_forward.1} parent=123 // pred_region
            // Predicated region
            $region129: #{memory_forward.1} parent=127 // pred_check
              _
            $region130: #{memory_forward.1} parent=127 // pred_check_branch
              %1005 = sbr.rel (0) target = $region132
            $region131: #{memory_forward.1} parent=127 // pred_region
              // Predicated region
              $region144: #{memory_forward.1} parent=131 // pred_check
                _
              $region145: #{memory_forward.1} parent=131 // pred_check_branch
                %1022 = sbr.rel (0) target = $region147
              $region146: #{memory_forward.1} parent=131 // pred_region
                loop: start=0, step=1, limit=1
                $region148: #{memory_forward.1} parent=146 // loop_pre_header
                  _
                $region149: #{memory_forward.1} parent=146 // loop_header
                  %s1024 = sphi 0, %s1028
                  %p1025 = scmp.ge.s32.totalorder %s1024, 1
                  %s1029 = sphi %s913, %s913
                  %s1030 = sphi %s1001, %s1001
                $region150: #{memory_forward.1} parent=146 // loop_header_branch
                  %1027 = sbr.rel (%p1025) target = $region154
                $region151: #{memory_forward.1} parent=146 // loop_body
                  %v1031 = vld [vmem:[%s1029] sm:$0xff]
                  %1032 = vst [vmem:[%s1030] sm:$0xff] %v1031
                  %v1033 = vld [vmem:[%s1029 + $0x8] sm:$0xff]
                  %1034 = vst [vmem:[%s1030 + $0x20] sm:$0xff] %v1033
                $region152: #{memory_forward.1} parent=146 // loop_footer
                  %s1028 = sadd.s32 1, %s1024
                $region153: #{memory_forward.1} parent=146 // loop_footer_branch
                  %1023 = sbr.rel target = $region149
                $region154: #{memory_forward.1} parent=146 // loop_exit
                  _
              $region147: #{memory_forward.1} parent=131 // pred_fallthru
                _
              // Predicated region
              $region155: #{memory_forward.1} parent=131 // pred_check
                _
              $region156: #{memory_forward.1} parent=131 // pred_check_branch
                %1036 = sbr.rel target = $region158
              $region157: #{memory_forward.1} parent=131 // pred_region
                _
              $region158: #{memory_forward.1} parent=131 // pred_fallthru
                _
            $region132: #{memory_forward.1} parent=127 // pred_fallthru
              _
            // Predicated region
            $region133: #{memory_forward.1} parent=127 // pred_check
              _
            $region134: #{memory_forward.1} parent=127 // pred_check_branch
              %1007 = sbr.rel target = $region136
            $region135: #{memory_forward.1} parent=127 // pred_region
              loop: start=0, step=1, limit=1
              $region137: #{memory_forward.1} parent=135 // loop_pre_header
                _
              $region138: #{memory_forward.1} parent=135 // loop_header
                %s1010 = sphi 0, %s1014
                %p1011 = scmp.ge.s32.totalorder %s1010, 1
                %s1015 = sphi %s913, %s913
                %s1016 = sphi %s1001, %s1001
              $region139: #{memory_forward.1} parent=135 // loop_header_branch
                %1013 = sbr.rel (%p1011) target = $region143
              $region140: #{memory_forward.1} parent=135 // loop_body
                %v1017 = vld [vmem:[%s1015] sm:$0xff]
                %1018 = vst [vmem:[%s1016] sm:$0xff] %v1017
                %v1019 = vld [vmem:[%s1015 + $0x8] sm:$0xff]
                %1020 = vst [vmem:[%s1016 + $0x20] sm:$0xff] %v1019
              $region141: #{memory_forward.1} parent=135 // loop_footer
                %s1014 = sadd.s32 1, %s1010
              $region142: #{memory_forward.1} parent=135 // loop_footer_branch
                %1009 = sbr.rel target = $region138
              $region143: #{memory_forward.1} parent=135 // loop_exit
                _
            $region136: #{memory_forward.1} parent=127 // pred_fallthru
              _
          $region128: #{memory_forward.1} parent=123 // pred_fallthru
            _
          %1037 = vnop
        $region124: #{memory_forward.1} parent=65 // pred_fallthru
          _
        // Predicated region
        $region159: #{memory_forward.1} parent=65 // pred_check
          %p1038 = pneg %p179
        $region160: #{memory_forward.1} parent=65 // pred_check_branch
          %1040 = sbr.rel (%p1038) target = $region162
        $region161: #{memory_forward.1} parent=65 // pred_region
          _
        $region162: #{memory_forward.1} parent=65 // pred_fallthru
          _
        // Predicated region
        $region163: #{memory_forward.1} parent=65 // pred_check
          %p1041 = pneg %p205
        $region164: #{memory_forward.1} parent=65 // pred_check_branch
          %1043 = sbr.rel (%p1041) target = $region166
        $region165: #{memory_forward.1} parent=65 // pred_region
          %s1045 = ssub.s32 256, 256
          %1046 = vsyncadd %s915, %s1045
          %s1047 = smul.addr %s25, 128
          %s1048 = scalar_lea.hbm %s7, %s1047
          %s1049 = sshll.u32 %s918, 4
          %s1050 = int_to_ptr.vmem [resolvable:$true] %s1049
          %1055 = dma.vmem_to_hbm [thread:$0]  %s1050, 256, %s1048, %s915, 128, 512, 8
        $region166: #{memory_forward.1} parent=65 // pred_fallthru
          _
        // Predicated region
        $region167: #{memory_forward.1} parent=65 // pred_check
          %p1056 = pneg %p226
        $region168: #{memory_forward.1} parent=65 // pred_check_branch
          %1058 = sbr.rel (%p1056) target = $region170
        $region169: #{memory_forward.1} parent=65 // pred_region
          %s1060 = ssub.s32 16, 16
          %1061 = vsyncadd [#allocation9], %s1060
          %s1063 = sshll.u32 %s8, 4
          %s1064 = int_to_ptr.vmem [resolvable:$true] %s1063
          %1066 = dma.smem_to_vmem [#allocation13], 16, %s1064, [#allocation9]
        $region170: #{memory_forward.1} parent=65 // pred_fallthru
          _
        // Predicated region
        $region171: #{memory_forward.1} parent=65 // pred_check
          %p1067 = pneg %p132
        $region172: #{memory_forward.1} parent=65 // pred_check_branch
          %1069 = sbr.rel (%p1067) target = $region174
        $region173: #{memory_forward.1} parent=65 // pred_region
          %1070 = dma.done [#allocation8], 256
        $region174: #{memory_forward.1} parent=65 // pred_fallthru
          _
        // Predicated region
        $region175: #{memory_forward.1} parent=65 // pred_check
          %p1071 = pneg %p179
        $region176: #{memory_forward.1} parent=65 // pred_check_branch
          %1073 = sbr.rel (%p1071) target = $region178
        $region177: #{memory_forward.1} parent=65 // pred_region
          _
        $region178: #{memory_forward.1} parent=65 // pred_fallthru
          _
        // Predicated region
        $region179: #{memory_forward.1} parent=65 // pred_check
          %p1074 = pneg %p226
        $region180: #{memory_forward.1} parent=65 // pred_check_branch
          %1076 = sbr.rel (%p1074) target = $region182
        $region181: #{memory_forward.1} parent=65 // pred_region
          %1077 = dma.done [#allocation9], 16
        $region182: #{memory_forward.1} parent=65 // pred_fallthru
          _
        %1078 = sfence
      $region66: #{memory_forward.1} parent=5 // pred_fallthru
        _
      %p1079 = scmp.le.s32.totalorder 2, %s20
      // Predicated region
      $region183: #{memory_forward.1} parent=5 // pred_check
        %p1080 = pneg %p1079
      $region184: #{memory_forward.1} parent=5 // pred_check_branch
        %1082 = sbr.rel (%p1080) target = $region186
      $region185: #{memory_forward.1} parent=5 // pred_region
        %s1083 = ssub.s32 %s20, 2
        // Predicated region
        $region187: #{memory_forward.1} parent=185 // pred_check
          %p1084 = pneg %p117
        $region188: #{memory_forward.1} parent=185 // pred_check_branch
          %1086 = sbr.rel (%p1084) target = $region190
        $region189: #{memory_forward.1} parent=185 // pred_region
          %s1087 = sand.u32 %s102, 1
          %s1088 = sand.u32 %s102, 1
          %s1089 = smul.addr %s1088, 64
          %s1090 = scalar_lea.vmem [#allocation6], %s1089
        $region190: #{memory_forward.1} parent=185 // pred_fallthru
          _
        // Predicated region
        $region191: #{memory_forward.1} parent=185 // pred_check
          %p1091 = pneg %p164
        $region192: #{memory_forward.1} parent=185 // pred_check_branch
          %1093 = sbr.rel (%p1091) target = $region194
        $region193: #{memory_forward.1} parent=185 // pred_region
          %s1094 = sand.u32 %s149, 1
          %s1095 = sand.u32 %s149, 1
          %s1096 = smul.addr %s1095, 16
          %s1097 = scalar_lea.vmem [#allocation10], %s1096
        $region194: #{memory_forward.1} parent=185 // pred_fallthru
          _
        // Predicated region
        $region195: #{memory_forward.1} parent=185 // pred_check
          %p1098 = pneg %p211
        $region196: #{memory_forward.1} parent=185 // pred_check_branch
          %1100 = sbr.rel (%p1098) target = $region198
        $region197: #{memory_forward.1} parent=185 // pred_region
          %s1101 = sand.u32 %s196, 1
          %s1102 = scalar_lea.sflag [#allocation12], %s1101
          %s1103 = sand.u32 %s196, 1
          %s1104 = smul.addr %s1103, 16
          %s1105 = scalar_lea.vmem [#allocation11], %s1104
          %1106 = dma.done %s1102, 256
        $region198: #{memory_forward.1} parent=185 // pred_fallthru
          _
      $region186: #{memory_forward.1} parent=5 // pred_fallthru
        _
    $region6: #{memory_forward.1} parent=1 // loop_footer
      %s24 = sadd.s32 1, %s20
    $region7: #{memory_forward.1} parent=1 // loop_footer_branch
      %19 = sbr.rel target = $region3
    $region8: #{memory_forward.1} parent=1 // loop_exit
      _
    %1107 = vsyncpa [#allocation8], 1
    %s1108 = scalar_lea.sflag [#allocation8], 1
    %1109 = vsyncpa %s1108, 1
    %1110 = vsyncpa [#allocation12], 1
    %s1111 = scalar_lea.sflag [#allocation12], 1
    %1112 = vsyncpa %s1111, 1
    %1113 = vsyncpa [#allocation9], 1
    %s1114 = scalar_lea.sflag [#allocation9], 1
    %1115 = vsyncpa %s1114, 1

</llo_original>
